<compile_context>
chip_gen: v7x
topology: tpu7x:2x2x1
jax: 0.10.0
libtpu: 0.0.40
codegen_flags: <defaults>
</compile_context>

<pallas_src>
import functools

import jax
import jax.numpy as jnp
from jax.experimental import pallas as pl
from jax.experimental.pallas import tpu as pltpu

EPS = 1e-5
NEG_SLOPE = 0.2


def residual_block_kernel(x_ref, w1mid_ref, w1ud_ref, g1_ref, be1_ref,
                          w2_ref, g2_ref, be2_ref,
                          gs_ref, bes_ref,
                          pool_ref, poolt_ref, out_ref, *, H):
    R, WCi = x_ref.shape                      # R = N*H rows, WCi = W*Cin lanes
    WCo = out_ref.shape[1]                    # W*Cout lanes
    Cout = pool_ref.shape[1]
    cnt = float(R * (WCo // Cout))            # N*H*W elements per channel

    # Per-image row-validity masks for the H-direction pad=1 halo, computed once
    # and reused by both 3x3 convs (hoisted out of the conv helper per review).
    y = jax.lax.broadcasted_iota(jnp.int32, (R, 1), 0) % H
    m_up = (y >= 1).astype(jnp.float32)       # row above exists inside own image
    m_dn = (y <= H - 2).astype(jnp.float32)   # row below exists inside own image

    def leaky(v):                             # LeakyReLU(0.2) as mul+max (2 VPU ops)
        return jnp.maximum(v, NEG_SLOPE * v)

    def shifted_bf16(a_f32):
        # up[i] = a[i-1], dn[i] = a[i+1]; rows outside their own image are zeroed.
        # pltpu.roll lands in the (otherwise idle) XLU slot; shift R-1 == -1 mod R.
        up = pltpu.roll(a_f32, shift=1, axis=0) * m_up
        dn = pltpu.roll(a_f32, shift=R - 1, axis=0) * m_dn
        return up.astype(jnp.bfloat16), dn.astype(jnp.bfloat16)

    x_c = x_ref[...]
    x_u, x_d = shifted_bf16(x_c)
    xb = x_c.astype(jnp.bfloat16)

    # conv1 (3x3) with the 1x1 shortcut fused into the output (N) columns of the
    # middle (unshifted) K-block.  Three accumulated K-split dots; the +/-1 row
    # taps use static slices of w1ud_ref (free views).
    mid = jnp.dot(xb, w1mid_ref[...], preferred_element_type=jnp.float32)      # (R, 2*WCo)
    y1 = (mid[:, :WCo]
          + jnp.dot(x_u, w1ud_ref[0:WCi, :], preferred_element_type=jnp.float32)
          + jnp.dot(x_d, w1ud_ref[WCi:2 * WCi, :], preferred_element_type=jnp.float32))
    sc_raw = mid[:, WCo:]                                                       # shortcut conv out

    # Batched training-mode BatchNorm for BN1 and BN_shortcut: single-pass
    # sum / sum-of-squares, one pooling dot and one broadcast dot for both.
    # TODO(synk): stats dots run at default matmul precision; switch to a shifted
    # two-pass variance (or precision=HIGHEST once supported) if tolerances tighten.
    sums = jnp.concatenate(
        [jnp.sum(y1, axis=0, keepdims=True),
         jnp.sum(y1 * y1, axis=0, keepdims=True),
         jnp.sum(sc_raw, axis=0, keepdims=True),
         jnp.sum(sc_raw * sc_raw, axis=0, keepdims=True)], axis=0)              # (4, WCo)
    stats = jnp.dot(sums, pool_ref[...], preferred_element_type=jnp.float32)    # (4, Cout)
    mean1 = stats[0:1, :] / cnt
    var1 = stats[1:2, :] / cnt - mean1 * mean1
    mean_s = stats[2:3, :] / cnt
    var_s = stats[3:4, :] / cnt - mean_s * mean_s
    scale1 = g1_ref[...] * jax.lax.rsqrt(var1 + EPS)
    shift1 = be1_ref[...] - mean1 * scale1
    scale_s = gs_ref[...] * jax.lax.rsqrt(var_s + EPS)
    shift_s = bes_ref[...] - mean_s * scale_s
    aff = jnp.dot(jnp.concatenate([scale1, shift1, scale_s, shift_s], axis=0),
                  poolt_ref[...], preferred_element_type=jnp.float32)           # (4, WCo)

    h = leaky(y1 * aff[0:1, :] + aff[1:2, :])          # BN1 + LeakyReLU
    sc = sc_raw * aff[2:3, :] + aff[3:4, :]            # BN_shortcut

    # conv2 (3x3): three K-split accumulated dots against static slices of w2_ref.
    h_u, h_d = shifted_bf16(h)
    hb = h.astype(jnp.bfloat16)
    y2 = (jnp.dot(h_u, w2_ref[0:WCo, :], preferred_element_type=jnp.float32)
          + jnp.dot(hb, w2_ref[WCo:2 * WCo, :], preferred_element_type=jnp.float32)
          + jnp.dot(h_d, w2_ref[2 * WCo:3 * WCo, :], preferred_element_type=jnp.float32))

    # BN2
    sums2 = jnp.concatenate([jnp.sum(y2, axis=0, keepdims=True),
                             jnp.sum(y2 * y2, axis=0, keepdims=True)], axis=0)  # (2, WCo)
    st2 = jnp.dot(sums2, pool_ref[...], preferred_element_type=jnp.float32)     # (2, Cout)
    mean2 = st2[0:1, :] / cnt
    var2 = st2[1:2, :] / cnt - mean2 * mean2
    scale2 = g2_ref[...] * jax.lax.rsqrt(var2 + EPS)
    shift2 = be2_ref[...] - mean2 * scale2
    aff2 = jnp.dot(jnp.concatenate([scale2, shift2], axis=0), poolt_ref[...],
                   preferred_element_type=jnp.float32)                          # (2, WCo)

    # residual add + final LeakyReLU, dense lane-aligned (N*H, W*Cout) store.
    out_ref[...] = leaky(y2 * aff2[0:1, :] + aff2[1:2, :] + sc)


def _banded_ky(w_kx_io, W):
    """One ky row of a 3x3 conv weight (3, Ci, Co) -> (W*Ci, W*Co) banded block.
    The 3 kx taps and the W-direction zero padding are encoded by the band."""
    _, Ci, Co = w_kx_io.shape
    b = jnp.zeros((W, Ci, W, Co), jnp.float32)
    for kx in range(3):
        e = jnp.eye(W, W, k=-(kx - 1), dtype=jnp.float32)   # e[a,b]=1 iff a = b + kx - 1
        b = b + jnp.einsum("ab,io->aibo", e, w_kx_io[kx])
    return b.reshape(W * Ci, W * Co)


def _banded_1x1(w, W):
    w = w.reshape(w.shape[-2], w.shape[-1])
    e = jnp.eye(W, dtype=jnp.float32)
    return jnp.einsum("ab,io->aibo", e, w).reshape(W * w.shape[0], W * w.shape[1])


def residual_block(x_nchw, params):
    """x_nchw: (N, Cin, H, W) float32; returns (N, Cout, H, W)."""
    x = jnp.transpose(x_nchw, (0, 2, 3, 1)).astype(jnp.float32)   # NHWC
    N, H, W, Cin = x.shape
    Cout = params["w1"].shape[-1]
    R = N * H
    x2 = x.reshape(R, W * Cin)                 # lane-dense 2D layout (free reshape)

    # Banded weights, kept as separate ky blocks (K-split dots in the kernel).
    w1_blk = [_banded_ky(params["w1"][ky], W) for ky in range(3)]   # each (W*Cin, W*Cout)
    wsb = _banded_1x1(params["ws"], W)                              # (W*Cin,  W*Cout)
    # Middle (unshifted) K-block fused with the 1x1 shortcut in the N columns.
    w1mid = jnp.concatenate([w1_blk[1], wsb], axis=1).astype(jnp.bfloat16)   # (W*Cin, 2*W*Cout)
    w1ud = jnp.concatenate([w1_blk[0], w1_blk[2]], axis=0).astype(jnp.bfloat16)  # (2*W*Cin, W*Cout)
    w2b = jnp.concatenate([_banded_ky(params["w2"][ky], W) for ky in range(3)],
                          axis=0).astype(jnp.bfloat16)              # (3*W*Cout, W*Cout)
    # TODO(synk): for Cin >= 128 the banded form inflates weights ~W^2/3x and wastes
    # MXU MACs; switch the kx taps to lane-rolled inputs with plain (Cin,Cout) weights.

    eye_c = jnp.eye(Cout, dtype=jnp.float32)
    pool = jnp.tile(eye_c, (W, 1))             # (W*Cout, Cout): lane -> channel reduce
    poolt = jnp.tile(eye_c, (1, W))            # (Cout, W*Cout): channel -> lane broadcast

    inputs = (x2,
              w1mid, w1ud, params["g1"], params["be1"],
              w2b, params["g2"], params["be2"],
              params["gs"], params["bes"],
              pool, poolt)

    def full_spec(a):
        nd = a.ndim
        return pl.BlockSpec(a.shape, lambda i, _nd=nd: (0,) * _nd)

    # Explicit scoped-VMEM budget: Pallas double-buffers every BlockSpec'd operand
    # even at grid=(1,); v5e's 16 MiB default is far below physical VMEM.
    out_bytes = R * W * Cout * 4
    operand_bytes = sum(int(a.size) * a.dtype.itemsize for a in inputs) + out_bytes
    interm_bytes = 12 * out_bytes              # live f32 intermediates inside kernel
    vmem_limit = min(max(2 * operand_bytes + interm_bytes + (4 << 20), 32 << 20),
                     100 << 20)

    out2 = pl.pallas_call(
        functools.partial(residual_block_kernel, H=H),
        out_shape=jax.ShapeDtypeStruct((R, W * Cout), jnp.float32),
        grid=(1,),
        in_specs=[full_spec(a) for a in inputs],
        out_specs=pl.BlockSpec((R, W * Cout), lambda i: (0, 0)),
        compiler_params=pltpu.CompilerParams(
            dimension_semantics=("arbitrary",),
            vmem_limit_bytes=int(vmem_limit)),
    )(*inputs)
    # TODO(synk): for large N*H*W, replace this single-grid-point resident design with
    # a row-tiled multi-sweep BN pipeline (conv sweep accumulating per-channel
    # sum/sumsq, then normalize+conv2 sweep, then normalize+add+leaky sweep) with the
    # row axis marked "parallel" so both v7x TensorCores are used and VMEM is bounded.
    out_nhwc = out2.reshape(N, H, W, Cout)
    return jnp.transpose(out_nhwc, (0, 3, 1, 2))               # -> NCHW


def make_params(key, cin, cout):
    ks = jax.random.split(key, 9)
    return {
        "w1": 0.2 * jax.random.normal(ks[0], (3, 3, cin, cout), jnp.float32),
        "b1": 0.1 * jax.random.normal(ks[1], (1, cout), jnp.float32),
        "g1": 1.0 + 0.1 * jax.random.normal(ks[2], (1, cout), jnp.float32),
        "be1": 0.1 * jax.random.normal(ks[3], (1, cout), jnp.float32),
        "w2": 0.2 * jax.random.normal(ks[4], (3, 3, cout, cout), jnp.float32),
        "b2": 0.1 * jax.random.normal(ks[5], (1, cout), jnp.float32),
        "g2": 1.0 + 0.1 * jax.random.normal(ks[6], (1, cout), jnp.float32),
        "be2": 0.1 * jax.random.normal(ks[7], (1, cout), jnp.float32),
        "ws": 0.2 * jax.random.normal(ks[8], (1, 1, cin, cout), jnp.float32),
        "bs": jnp.zeros((1, cout), jnp.float32),
        "gs": jnp.ones((1, cout), jnp.float32),
        "bes": jnp.zeros((1, cout), jnp.float32),
    }


def reference_forward(x_nchw, p):
    """Pure-JAX f32 reference (XLA convs, with the conv biases included)."""
    x = jnp.transpose(x_nchw, (0, 2, 3, 1))
    dn = ("NHWC", "HWIO", "NHWC")

    def conv(y, w, b, pad):
        o = jax.lax.conv_general_dilated(y, w, (1, 1), pad, dimension_numbers=dn)
        return o + b.reshape(1, 1, 1, -1)

    def bn(y, g, b):
        m = jnp.mean(y, axis=(0, 1, 2), keepdims=True)
        v = jnp.mean((y - m) ** 2, axis=(0, 1, 2), keepdims=True)
        return (y - m) * g.reshape(1, 1, 1, -1) / jnp.sqrt(v + EPS) + b.reshape(1, 1, 1, -1)

    def lrelu(y):
        return jnp.where(y > 0, y, NEG_SLOPE * y)

    h = lrelu(bn(conv(x, p["w1"], p["b1"], "SAME"), p["g1"], p["be1"]))
    h2 = bn(conv(h, p["w2"], p["b2"], "SAME"), p["g2"], p["be2"])
    sc = bn(conv(x, p["ws"], p["bs"], "VALID"), p["gs"], p["bes"])
    return jnp.transpose(lrelu(h2 + sc), (0, 3, 1, 2))


if __name__ == "__main__":
    N, CIN, COUT, H, W = 2, 4, 8, 16, 16    # in_channels != out_channels -> shortcut path

    key = jax.random.PRNGKey(0)
    kx, kp = jax.random.split(key)
    x = jax.random.normal(kx, (N, CIN, H, W), jnp.float32)   # PyTorch-style NCHW input
    params = make_params(kp, CIN, COUT)

    out = jax.block_until_ready(residual_block(x, params))
    assert out.shape == (N, COUT, H, W)

    ref = jax.block_until_ready(reference_forward(x, params))
    max_err = float(jnp.max(jnp.abs(out - ref)))
    assert max_err < 5e-2, f"mismatch vs reference: {max_err}"

    print("KERNEL_OK")
</pallas_src>

<mosaic_0001>
module attributes {stable_mosaic.version = 11 : i64} {
  func.func @residual_block_kernel(%arg0: i32, %arg1: memref<32x64xf32, #tpu.memory_space<vmem>>, %arg2: memref<64x256xbf16, #tpu.memory_space<vmem>>, %arg3: memref<128x128xbf16, #tpu.memory_space<vmem>>, %arg4: memref<1x8xf32, #tpu.memory_space<vmem>>, %arg5: memref<1x8xf32, #tpu.memory_space<vmem>>, %arg6: memref<384x128xbf16, #tpu.memory_space<vmem>>, %arg7: memref<1x8xf32, #tpu.memory_space<vmem>>, %arg8: memref<1x8xf32, #tpu.memory_space<vmem>>, %arg9: memref<1x8xf32, #tpu.memory_space<vmem>>, %arg10: memref<1x8xf32, #tpu.memory_space<vmem>>, %arg11: memref<128x8xf32, #tpu.memory_space<vmem>>, %arg12: memref<8x128xf32, #tpu.memory_space<vmem>>, %arg13: memref<32x128xf32, #tpu.memory_space<vmem>>) attributes {dimension_semantics = [#tpu.dimension_semantics<arbitrary>], iteration_bounds = array<i64: 1>, scalar_prefetch = 0 : i64, scratch_operands = 0 : i64, tpu.core_type = #tpu.core_type<tc>, window_params = [{pipeline_mode = #tpu.pipeline_mode<synchronous>, transform_indices = @transform_0, window_bounds = array<i64: 32, 64>}, {pipeline_mode = #tpu.pipeline_mode<synchronous>, transform_indices = @transform_1, window_bounds = array<i64: 64, 256>}, {pipeline_mode = #tpu.pipeline_mode<synchronous>, transform_indices = @transform_2, window_bounds = array<i64: 128, 128>}, {pipeline_mode = #tpu.pipeline_mode<synchronous>, transform_indices = @transform_3, window_bounds = array<i64: 1, 8>}, {pipeline_mode = #tpu.pipeline_mode<synchronous>, transform_indices = @transform_4, window_bounds = array<i64: 1, 8>}, {pipeline_mode = #tpu.pipeline_mode<synchronous>, transform_indices = @transform_5, window_bounds = array<i64: 384, 128>}, {pipeline_mode = #tpu.pipeline_mode<synchronous>, transform_indices = @transform_6, window_bounds = array<i64: 1, 8>}, {pipeline_mode = #tpu.pipeline_mode<synchronous>, transform_indices = @transform_7, window_bounds = array<i64: 1, 8>}, {pipeline_mode = #tpu.pipeline_mode<synchronous>, transform_indices = @transform_8, window_bounds = array<i64: 1, 8>}, {pipeline_mode = #tpu.pipeline_mode<synchronous>, transform_indices = @transform_9, window_bounds = array<i64: 1, 8>}, {pipeline_mode = #tpu.pipeline_mode<synchronous>, transform_indices = @transform_10, window_bounds = array<i64: 128, 8>}, {pipeline_mode = #tpu.pipeline_mode<synchronous>, transform_indices = @transform_11, window_bounds = array<i64: 8, 128>}, {pipeline_mode = #tpu.pipeline_mode<synchronous>, transform_indices = @transform_12, window_bounds = array<i64: 32, 128>}]} {
    %0 = tpu.iota {dimensions = array<i32: 0>} : vector<32x1xi32>
    %c16_i32 = arith.constant 16 : i32
    %c0_i32 = arith.constant 0 : i32
    %1 = arith.cmpi eq, %c16_i32, %c0_i32 : i32
    %c1_i32 = arith.constant 1 : i32
    %2 = arith.select %1, %c1_i32, %c16_i32 : i32
    %3 = vector.broadcast %2 : i32 to vector<32x1xi32>
    %4 = arith.remsi %0, %3 : vector<32x1xi32>
    %c0_i32_0 = arith.constant 0 : i32
    %5 = vector.broadcast %c0_i32_0 : i32 to vector<32x1xi32>
    %6 = arith.cmpi ne, %4, %5 : vector<32x1xi32>
    %c0_i32_1 = arith.constant 0 : i32
    %7 = vector.broadcast %c0_i32_1 : i32 to vector<32x1xi32>
    %8 = arith.cmpi slt, %4, %7 : vector<32x1xi32>
    %c0_i32_2 = arith.constant 0 : i32
    %9 = arith.cmpi slt, %2, %c0_i32_2 : i32
    %10 = vector.broadcast %9 : i1 to vector<32x1xi1>
    %11 = vector.broadcast %10 : vector<32x1xi1> to vector<32x1xi1>
    %12 = arith.xori %8, %11 : vector<32x1xi1>
    %13 = arith.andi %12, %6 : vector<32x1xi1>
    %14 = vector.broadcast %2 : i32 to vector<32x1xi32>
    %15 = arith.addi %4, %14 : vector<32x1xi32>
    %16 = arith.select %13, %15, %4 : vector<32x1xi1>, vector<32x1xi32>
    %c1_i32_3 = arith.constant 1 : i32
    %17 = vector.broadcast %c1_i32_3 : i32 to vector<32x1xi32>
    %18 = arith.cmpi sge, %16, %17 : vector<32x1xi32>
    %19 = arith.extui %18 : vector<32x1xi1> to vector<32x1xi32>
    %20 = arith.sitofp %19 : vector<32x1xi32> to vector<32x1xf32>
    %c14_i32 = arith.constant 14 : i32
    %21 = vector.broadcast %c14_i32 : i32 to vector<32x1xi32>
    %22 = arith.cmpi sle, %16, %21 : vector<32x1xi32>
    %23 = arith.extui %22 : vector<32x1xi1> to vector<32x1xi32>
    %24 = arith.sitofp %23 : vector<32x1xi32> to vector<32x1xf32>
    %c0 = arith.constant 0 : index
    %c0_4 = arith.constant 0 : index
    %25 = vector.load %arg1[%c0, %c0_4] : memref<32x64xf32, #tpu.memory_space<vmem>>, vector<32x64xf32>
    %c1_i32_5 = arith.constant 1 : i32
    %26 = tpu.dynamic_rotate %25 by %c1_i32_5 dim 0 : vector<32x64xf32>, i32 -> vector<32x64xf32>
    %27 = vector.broadcast %20 : vector<32x1xf32> to vector<32x64xf32>
    %28 = arith.mulf %26, %27 : vector<32x64xf32>
    %c31_i32 = arith.constant 31 : i32
    %29 = tpu.dynamic_rotate %25 by %c31_i32 dim 0 : vector<32x64xf32>, i32 -> vector<32x64xf32>
    %30 = vector.broadcast %24 : vector<32x1xf32> to vector<32x64xf32>
    %31 = arith.mulf %29, %30 : vector<32x64xf32>
    %32 = arith.truncf %28 : vector<32x64xf32> to vector<32x64xbf16>
    %33 = arith.truncf %31 : vector<32x64xf32> to vector<32x64xbf16>
    %34 = arith.truncf %25 : vector<32x64xf32> to vector<32x64xbf16>
    %c0_6 = arith.constant 0 : index
    %c0_7 = arith.constant 0 : index
    %35 = vector.load %arg2[%c0_6, %c0_7] : memref<64x256xbf16, #tpu.memory_space<vmem>>, vector<64x256xbf16>
    %cst = arith.constant dense<0.000000e+00> : vector<32x256xf32>
    %36 = tpu.matmul %34, %35, %cst {dimension_numbers = #tpu.dot_dimension_numbers<[1], [0], [0], [1], [0, 0, 1, 1], [], []>} : vector<32x64xbf16>, vector<64x256xbf16>, vector<32x256xf32> -> vector<32x256xf32>
    %37 = vector.extract_strided_slice %36 {offsets = [0, 0], sizes = [32, 128], strides = [1, 1]} : vector<32x256xf32> to vector<32x128xf32>
    %c0_8 = arith.constant 0 : index
    %c0_9 = arith.constant 0 : index
    %38 = vector.load %arg3[%c0_8, %c0_9] : memref<128x128xbf16, #tpu.memory_space<vmem>>, vector<64x128xbf16>
    %cst_10 = arith.constant dense<0.000000e+00> : vector<32x128xf32>
    %39 = tpu.matmul %32, %38, %cst_10 {dimension_numbers = #tpu.dot_dimension_numbers<[1], [0], [0], [1], [0, 0, 1, 1], [], []>} : vector<32x64xbf16>, vector<64x128xbf16>, vector<32x128xf32> -> vector<32x128xf32>
    %40 = arith.addf %37, %39 : vector<32x128xf32>
    %c64 = arith.constant 64 : index
    %c0_11 = arith.constant 0 : index
    %41 = vector.load %arg3[%c64, %c0_11] : memref<128x128xbf16, #tpu.memory_space<vmem>>, vector<64x128xbf16>
    %cst_12 = arith.constant dense<0.000000e+00> : vector<32x128xf32>
    %42 = tpu.matmul %33, %41, %cst_12 {dimension_numbers = #tpu.dot_dimension_numbers<[1], [0], [0], [1], [0, 0, 1, 1], [], []>} : vector<32x64xbf16>, vector<64x128xbf16>, vector<32x128xf32> -> vector<32x128xf32>
    %43 = arith.addf %40, %42 : vector<32x128xf32>
    %44 = vector.extract_strided_slice %36 {offsets = [0, 128], sizes = [32, 128], strides = [1, 1]} : vector<32x256xf32> to vector<32x128xf32>
    %cst_13 = arith.constant dense<0.000000e+00> : vector<128xf32>
    %45 = vector.multi_reduction <add>, %43, %cst_13 [0] : vector<32x128xf32> to vector<128xf32>
    %46 = vector.shape_cast %45 : vector<128xf32> to vector<1x128xf32>
    %47 = arith.mulf %43, %43 : vector<32x128xf32>
    %cst_14 = arith.constant dense<0.000000e+00> : vector<128xf32>
    %48 = vector.multi_reduction <add>, %47, %cst_14 [0] : vector<32x128xf32> to vector<128xf32>
    %49 = vector.shape_cast %48 : vector<128xf32> to vector<1x128xf32>
    %cst_15 = arith.constant dense<0.000000e+00> : vector<128xf32>
    %50 = vector.multi_reduction <add>, %44, %cst_15 [0] : vector<32x128xf32> to vector<128xf32>
    %51 = vector.shape_cast %50 : vector<128xf32> to vector<1x128xf32>
    %52 = arith.mulf %44, %44 : vector<32x128xf32>
    %cst_16 = arith.constant dense<0.000000e+00> : vector<128xf32>
    %53 = vector.multi_reduction <add>, %52, %cst_16 [0] : vector<32x128xf32> to vector<128xf32>
    %54 = vector.shape_cast %53 : vector<128xf32> to vector<1x128xf32>
    %55 = tpu.concatenate %46, %49, %51, %54 in 0 : vector<1x128xf32>, vector<1x128xf32>, vector<1x128xf32>, vector<1x128xf32> -> vector<4x128xf32>
    %c0_17 = arith.constant 0 : index
    %c0_18 = arith.constant 0 : index
    %56 = vector.load %arg11[%c0_17, %c0_18] : memref<128x8xf32, #tpu.memory_space<vmem>>, vector<128x8xf32>
    %cst_19 = arith.constant dense<0.000000e+00> : vector<4x8xf32>
    %57 = tpu.matmul %55, %56, %cst_19 {dimension_numbers = #tpu.dot_dimension_numbers<[1], [0], [0], [1], [0, 0, 1, 1], [], []>} : vector<4x128xf32>, vector<128x8xf32>, vector<4x8xf32> -> vector<4x8xf32>
    %58 = vector.extract_strided_slice %57 {offsets = [0, 0], sizes = [1, 8], strides = [1, 1]} : vector<4x8xf32> to vector<1x8xf32>
    %cst_20 = arith.constant 5.120000e+02 : f32
    %59 = vector.broadcast %cst_20 : f32 to vector<1x8xf32>
    %60 = arith.divf %58, %59 : vector<1x8xf32>
    %61 = vector.extract_strided_slice %57 {offsets = [1, 0], sizes = [1, 8], strides = [1, 1]} : vector<4x8xf32> to vector<1x8xf32>
    %cst_21 = arith.constant 5.120000e+02 : f32
    %62 = vector.broadcast %cst_21 : f32 to vector<1x8xf32>
    %63 = arith.divf %61, %62 : vector<1x8xf32>
    %64 = arith.mulf %60, %60 : vector<1x8xf32>
    %65 = arith.subf %63, %64 : vector<1x8xf32>
    %66 = vector.extract_strided_slice %57 {offsets = [2, 0], sizes = [1, 8], strides = [1, 1]} : vector<4x8xf32> to vector<1x8xf32>
    %cst_22 = arith.constant 5.120000e+02 : f32
    %67 = vector.broadcast %cst_22 : f32 to vector<1x8xf32>
    %68 = arith.divf %66, %67 : vector<1x8xf32>
    %69 = vector.extract_strided_slice %57 {offsets = [3, 0], sizes = [1, 8], strides = [1, 1]} : vector<4x8xf32> to vector<1x8xf32>
    %cst_23 = arith.constant 5.120000e+02 : f32
    %70 = vector.broadcast %cst_23 : f32 to vector<1x8xf32>
    %71 = arith.divf %69, %70 : vector<1x8xf32>
    %72 = arith.mulf %68, %68 : vector<1x8xf32>
    %73 = arith.subf %71, %72 : vector<1x8xf32>
    %c0_24 = arith.constant 0 : index
    %c0_25 = arith.constant 0 : index
    %74 = vector.load %arg4[%c0_24, %c0_25] : memref<1x8xf32, #tpu.memory_space<vmem>>, vector<1x8xf32>
    %cst_26 = arith.constant 9.99999974E-6 : f32
    %75 = vector.broadcast %cst_26 : f32 to vector<1x8xf32>
    %76 = arith.addf %65, %75 : vector<1x8xf32>
    %77 = math.rsqrt %76 : vector<1x8xf32>
    %78 = arith.mulf %74, %77 : vector<1x8xf32>
    %c0_27 = arith.constant 0 : index
    %c0_28 = arith.constant 0 : index
    %79 = vector.load %arg5[%c0_27, %c0_28] : memref<1x8xf32, #tpu.memory_space<vmem>>, vector<1x8xf32>
    %80 = arith.mulf %60, %78 : vector<1x8xf32>
    %81 = arith.subf %79, %80 : vector<1x8xf32>
    %c0_29 = arith.constant 0 : index
    %c0_30 = arith.constant 0 : index
    %82 = vector.load %arg9[%c0_29, %c0_30] : memref<1x8xf32, #tpu.memory_space<vmem>>, vector<1x8xf32>
    %cst_31 = arith.constant 9.99999974E-6 : f32
    %83 = vector.broadcast %cst_31 : f32 to vector<1x8xf32>
    %84 = arith.addf %73, %83 : vector<1x8xf32>
    %85 = math.rsqrt %84 : vector<1x8xf32>
    %86 = arith.mulf %82, %85 : vector<1x8xf32>
    %c0_32 = arith.constant 0 : index
    %c0_33 = arith.constant 0 : index
    %87 = vector.load %arg10[%c0_32, %c0_33] : memref<1x8xf32, #tpu.memory_space<vmem>>, vector<1x8xf32>
    %88 = arith.mulf %68, %86 : vector<1x8xf32>
    %89 = arith.subf %87, %88 : vector<1x8xf32>
    %90 = tpu.concatenate %78, %81, %86, %89 in 0 : vector<1x8xf32>, vector<1x8xf32>, vector<1x8xf32>, vector<1x8xf32> -> vector<4x8xf32>
    %c0_34 = arith.constant 0 : index
    %c0_35 = arith.constant 0 : index
    %91 = vector.load %arg12[%c0_34, %c0_35] : memref<8x128xf32, #tpu.memory_space<vmem>>, vector<8x128xf32>
    %cst_36 = arith.constant dense<0.000000e+00> : vector<4x128xf32>
    %92 = tpu.matmul %90, %91, %cst_36 {dimension_numbers = #tpu.dot_dimension_numbers<[1], [0], [0], [1], [0, 0, 1, 1], [], []>} : vector<4x8xf32>, vector<8x128xf32>, vector<4x128xf32> -> vector<4x128xf32>
    %93 = vector.extract_strided_slice %92 {offsets = [0, 0], sizes = [1, 128], strides = [1, 1]} : vector<4x128xf32> to vector<1x128xf32>
    %94 = vector.broadcast %93 : vector<1x128xf32> to vector<32x128xf32>
    %95 = arith.mulf %43, %94 : vector<32x128xf32>
    %96 = vector.extract_strided_slice %92 {offsets = [1, 0], sizes = [1, 128], strides = [1, 1]} : vector<4x128xf32> to vector<1x128xf32>
    %97 = vector.broadcast %96 : vector<1x128xf32> to vector<32x128xf32>
    %98 = arith.addf %95, %97 : vector<32x128xf32>
    %cst_37 = arith.constant 2.000000e-01 : f32
    %99 = vector.broadcast %cst_37 : f32 to vector<32x128xf32>
    %100 = arith.mulf %99, %98 : vector<32x128xf32>
    %101 = arith.maximumf %98, %100 : vector<32x128xf32>
    %102 = vector.extract_strided_slice %92 {offsets = [2, 0], sizes = [1, 128], strides = [1, 1]} : vector<4x128xf32> to vector<1x128xf32>
    %103 = vector.broadcast %102 : vector<1x128xf32> to vector<32x128xf32>
    %104 = arith.mulf %44, %103 : vector<32x128xf32>
    %105 = vector.extract_strided_slice %92 {offsets = [3, 0], sizes = [1, 128], strides = [1, 1]} : vector<4x128xf32> to vector<1x128xf32>
    %106 = vector.broadcast %105 : vector<1x128xf32> to vector<32x128xf32>
    %107 = arith.addf %104, %106 : vector<32x128xf32>
    %c1_i32_38 = arith.constant 1 : i32
    %108 = tpu.dynamic_rotate %101 by %c1_i32_38 dim 0 : vector<32x128xf32>, i32 -> vector<32x128xf32>
    %109 = vector.broadcast %20 : vector<32x1xf32> to vector<32x128xf32>
    %110 = arith.mulf %108, %109 : vector<32x128xf32>
    %c31_i32_39 = arith.constant 31 : i32
    %111 = tpu.dynamic_rotate %101 by %c31_i32_39 dim 0 : vector<32x128xf32>, i32 -> vector<32x128xf32>
    %112 = vector.broadcast %24 : vector<32x1xf32> to vector<32x128xf32>
    %113 = arith.mulf %111, %112 : vector<32x128xf32>
    %114 = arith.truncf %110 : vector<32x128xf32> to vector<32x128xbf16>
    %115 = arith.truncf %113 : vector<32x128xf32> to vector<32x128xbf16>
    %116 = arith.truncf %101 : vector<32x128xf32> to vector<32x128xbf16>
    %c0_40 = arith.constant 0 : index
    %c0_41 = arith.constant 0 : index
    %117 = vector.load %arg6[%c0_40, %c0_41] : memref<384x128xbf16, #tpu.memory_space<vmem>>, vector<128x128xbf16>
    %cst_42 = arith.constant dense<0.000000e+00> : vector<32x128xf32>
    %118 = tpu.matmul %114, %117, %cst_42 {dimension_numbers = #tpu.dot_dimension_numbers<[1], [0], [0], [1], [0, 0, 1, 1], [], []>} : vector<32x128xbf16>, vector<128x128xbf16>, vector<32x128xf32> -> vector<32x128xf32>
    %c128 = arith.constant 128 : index
    %c0_43 = arith.constant 0 : index
    %119 = vector.load %arg6[%c128, %c0_43] : memref<384x128xbf16, #tpu.memory_space<vmem>>, vector<128x128xbf16>
    %cst_44 = arith.constant dense<0.000000e+00> : vector<32x128xf32>
    %120 = tpu.matmul %116, %119, %cst_44 {dimension_numbers = #tpu.dot_dimension_numbers<[1], [0], [0], [1], [0, 0, 1, 1], [], []>} : vector<32x128xbf16>, vector<128x128xbf16>, vector<32x128xf32> -> vector<32x128xf32>
    %121 = arith.addf %118, %120 : vector<32x128xf32>
    %c256 = arith.constant 256 : index
    %c0_45 = arith.constant 0 : index
    %122 = vector.load %arg6[%c256, %c0_45] : memref<384x128xbf16, #tpu.memory_space<vmem>>, vector<128x128xbf16>
    %cst_46 = arith.constant dense<0.000000e+00> : vector<32x128xf32>
    %123 = tpu.matmul %115, %122, %cst_46 {dimension_numbers = #tpu.dot_dimension_numbers<[1], [0], [0], [1], [0, 0, 1, 1], [], []>} : vector<32x128xbf16>, vector<128x128xbf16>, vector<32x128xf32> -> vector<32x128xf32>
    %124 = arith.addf %121, %123 : vector<32x128xf32>
    %cst_47 = arith.constant dense<0.000000e+00> : vector<128xf32>
    %125 = vector.multi_reduction <add>, %124, %cst_47 [0] : vector<32x128xf32> to vector<128xf32>
    %126 = vector.shape_cast %125 : vector<128xf32> to vector<1x128xf32>
    %127 = arith.mulf %124, %124 : vector<32x128xf32>
    %cst_48 = arith.constant dense<0.000000e+00> : vector<128xf32>
    %128 = vector.multi_reduction <add>, %127, %cst_48 [0] : vector<32x128xf32> to vector<128xf32>
    %129 = vector.shape_cast %128 : vector<128xf32> to vector<1x128xf32>
    %130 = tpu.concatenate %126, %129 in 0 : vector<1x128xf32>, vector<1x128xf32> -> vector<2x128xf32>
    %c0_49 = arith.constant 0 : index
    %c0_50 = arith.constant 0 : index
    %131 = vector.load %arg11[%c0_49, %c0_50] : memref<128x8xf32, #tpu.memory_space<vmem>>, vector<128x8xf32>
    %cst_51 = arith.constant dense<0.000000e+00> : vector<2x8xf32>
    %132 = tpu.matmul %130, %131, %cst_51 {dimension_numbers = #tpu.dot_dimension_numbers<[1], [0], [0], [1], [0, 0, 1, 1], [], []>} : vector<2x128xf32>, vector<128x8xf32>, vector<2x8xf32> -> vector<2x8xf32>
    %133 = vector.extract_strided_slice %132 {offsets = [0, 0], sizes = [1, 8], strides = [1, 1]} : vector<2x8xf32> to vector<1x8xf32>
    %cst_52 = arith.constant 5.120000e+02 : f32
    %134 = vector.broadcast %cst_52 : f32 to vector<1x8xf32>
    %135 = arith.divf %133, %134 : vector<1x8xf32>
    %136 = vector.extract_strided_slice %132 {offsets = [1, 0], sizes = [1, 8], strides = [1, 1]} : vector<2x8xf32> to vector<1x8xf32>
    %cst_53 = arith.constant 5.120000e+02 : f32
    %137 = vector.broadcast %cst_53 : f32 to vector<1x8xf32>
    %138 = arith.divf %136, %137 : vector<1x8xf32>
    %139 = arith.mulf %135, %135 : vector<1x8xf32>
    %140 = arith.subf %138, %139 : vector<1x8xf32>
    %c0_54 = arith.constant 0 : index
    %c0_55 = arith.constant 0 : index
    %141 = vector.load %arg7[%c0_54, %c0_55] : memref<1x8xf32, #tpu.memory_space<vmem>>, vector<1x8xf32>
    %cst_56 = arith.constant 9.99999974E-6 : f32
    %142 = vector.broadcast %cst_56 : f32 to vector<1x8xf32>
    %143 = arith.addf %140, %142 : vector<1x8xf32>
    %144 = math.rsqrt %143 : vector<1x8xf32>
    %145 = arith.mulf %141, %144 : vector<1x8xf32>
    %c0_57 = arith.constant 0 : index
    %c0_58 = arith.constant 0 : index
    %146 = vector.load %arg8[%c0_57, %c0_58] : memref<1x8xf32, #tpu.memory_space<vmem>>, vector<1x8xf32>
    %147 = arith.mulf %135, %145 : vector<1x8xf32>
    %148 = arith.subf %146, %147 : vector<1x8xf32>
    %149 = tpu.concatenate %145, %148 in 0 : vector<1x8xf32>, vector<1x8xf32> -> vector<2x8xf32>
    %c0_59 = arith.constant 0 : index
    %c0_60 = arith.constant 0 : index
    %150 = vector.load %arg12[%c0_59, %c0_60] : memref<8x128xf32, #tpu.memory_space<vmem>>, vector<8x128xf32>
    %cst_61 = arith.constant dense<0.000000e+00> : vector<2x128xf32>
    %151 = tpu.matmul %149, %150, %cst_61 {dimension_numbers = #tpu.dot_dimension_numbers<[1], [0], [0], [1], [0, 0, 1, 1], [], []>} : vector<2x8xf32>, vector<8x128xf32>, vector<2x128xf32> -> vector<2x128xf32>
    %152 = vector.extract_strided_slice %151 {offsets = [0, 0], sizes = [1, 128], strides = [1, 1]} : vector<2x128xf32> to vector<1x128xf32>
    %153 = vector.broadcast %152 : vector<1x128xf32> to vector<32x128xf32>
    %154 = arith.mulf %124, %153 : vector<32x128xf32>
    %155 = vector.extract_strided_slice %151 {offsets = [1, 0], sizes = [1, 128], strides = [1, 1]} : vector<2x128xf32> to vector<1x128xf32>
    %156 = vector.broadcast %155 : vector<1x128xf32> to vector<32x128xf32>
    %157 = arith.addf %154, %156 : vector<32x128xf32>
    %158 = arith.addf %157, %107 : vector<32x128xf32>
    %cst_62 = arith.constant 2.000000e-01 : f32
    %159 = vector.broadcast %cst_62 : f32 to vector<32x128xf32>
    %160 = arith.mulf %159, %158 : vector<32x128xf32>
    %161 = arith.maximumf %158, %160 : vector<32x128xf32>
    %c0_63 = arith.constant 0 : index
    %c0_64 = arith.constant 0 : index
    %162 = vector.load %arg13[%c0_63, %c0_64] : memref<32x128xf32, #tpu.memory_space<vmem>>, vector<32x128xf32>
    tpu.vector_store %arg13[%c0_63, %c0_64], %161 {strides = array<i32>} : memref<32x128xf32, #tpu.memory_space<vmem>>, vector<32x128xf32>,
    return
  }
  func.func @transform_0(%arg0: i32) -> (i32, i32) {
    %c0_i32 = arith.constant 0 : i32
    %c0_i32_0 = arith.constant 0 : i32
    %c0_i32_1 = arith.constant 0 : i32
    return %c0_i32, %c0_i32_0 : i32, i32
  }
  func.func @transform_1(%arg0: i32) -> (i32, i32) {
    %c0_i32 = arith.constant 0 : i32
    %c0_i32_0 = arith.constant 0 : i32
    %c0_i32_1 = arith.constant 0 : i32
    return %c0_i32, %c0_i32_0 : i32, i32
  }
  func.func @transform_2(%arg0: i32) -> (i32, i32) {
    %c0_i32 = arith.constant 0 : i32
    %c0_i32_0 = arith.constant 0 : i32
    %c0_i32_1 = arith.constant 0 : i32
    return %c0_i32, %c0_i32_0 : i32, i32
  }
  func.func @transform_3(%arg0: i32) -> (i32, i32) {
    %c0_i32 = arith.constant 0 : i32
    %c0_i32_0 = arith.constant 0 : i32
    %c0_i32_1 = arith.constant 0 : i32
    return %c0_i32, %c0_i32_0 : i32, i32
  }
  func.func @transform_4(%arg0: i32) -> (i32, i32) {
    %c0_i32 = arith.constant 0 : i32
    %c0_i32_0 = arith.constant 0 : i32
    %c0_i32_1 = arith.constant 0 : i32
    return %c0_i32, %c0_i32_0 : i32, i32
  }
  func.func @transform_5(%arg0: i32) -> (i32, i32) {
    %c0_i32 = arith.constant 0 : i32
    %c0_i32_0 = arith.constant 0 : i32
    %c0_i32_1 = arith.constant 0 : i32
    return %c0_i32, %c0_i32_0 : i32, i32
  }
  func.func @transform_6(%arg0: i32) -> (i32, i32) {
    %c0_i32 = arith.constant 0 : i32
    %c0_i32_0 = arith.constant 0 : i32
    %c0_i32_1 = arith.constant 0 : i32
    return %c0_i32, %c0_i32_0 : i32, i32
  }
  func.func @transform_7(%arg0: i32) -> (i32, i32) {
    %c0_i32 = arith.constant 0 : i32
    %c0_i32_0 = arith.constant 0 : i32
    %c0_i32_1 = arith.constant 0 : i32
    return %c0_i32, %c0_i32_0 : i32, i32
  }
  func.func @transform_8(%arg0: i32) -> (i32, i32) {
    %c0_i32 = arith.constant 0 : i32
    %c0_i32_0 = arith.constant 0 : i32
    %c0_i32_1 = arith.constant 0 : i32
    return %c0_i32, %c0_i32_0 : i32, i32
  }
  func.func @transform_9(%arg0: i32) -> (i32, i32) {
    %c0_i32 = arith.constant 0 : i32
    %c0_i32_0 = arith.constant 0 : i32
    %c0_i32_1 = arith.constant 0 : i32
    return %c0_i32, %c0_i32_0 : i32, i32
  }
  func.func @transform_10(%arg0: i32) -> (i32, i32) {
    %c0_i32 = arith.constant 0 : i32
    %c0_i32_0 = arith.constant 0 : i32
    %c0_i32_1 = arith.constant 0 : i32
    return %c0_i32, %c0_i32_0 : i32, i32
  }
  func.func @transform_11(%arg0: i32) -> (i32, i32) {
    %c0_i32 = arith.constant 0 : i32
    %c0_i32_0 = arith.constant 0 : i32
    %c0_i32_1 = arith.constant 0 : i32
    return %c0_i32, %c0_i32_0 : i32, i32
  }
  func.func @transform_12(%arg0: i32) -> (i32, i32) {
    %c0_i32 = arith.constant 0 : i32
    %c0_i32_0 = arith.constant 0 : i32
    %c0_i32_1 = arith.constant 0 : i32
    return %c0_i32, %c0_i32_0 : i32, i32
  }
}

</mosaic_0001>

<llo_original>
// kernel: tpu_custom_call.1
$region0: #{tpu_custom_call.1}
  #allocation0 [shape = 'u32[]', space=smem, size = 0x4, offset = 0x4, fixed_abs, tag = 'smem constant byte address 0x4 - core index']
  #allocation1 [shape = 'u32[144,128]{1,0:T(1,128)}', space=vmem, size = 0x12000, scoped, tag = 'internal scratch']
  %s0 = inlined_call_operand.hbm [shape: f32[32,64], index: 0, kind: input, shape index: {}]
  %s1 = inlined_call_operand.vmem [shape: bf16[64,256], index: 1, kind: input, shape index: {}]
  %s2 = inlined_call_operand.vmem [shape: bf16[128,128], index: 2, kind: input, shape index: {}]
  %s3 = inlined_call_operand.vmem [shape: f32[1,8], index: 3, kind: input, shape index: {}]
  %s4 = inlined_call_operand.vmem [shape: f32[1,8], index: 4, kind: input, shape index: {}]
  %s5 = inlined_call_operand.hbm [shape: bf16[384,128], index: 5, kind: input, shape index: {}]
  %s6 = inlined_call_operand.vmem [shape: f32[1,8], index: 6, kind: input, shape index: {}]
  %s7 = inlined_call_operand.vmem [shape: f32[1,8], index: 7, kind: input, shape index: {}]
  %s8 = inlined_call_operand.vmem [shape: f32[1,8], index: 8, kind: input, shape index: {}]
  %s9 = inlined_call_operand.vmem [shape: f32[1,8], index: 9, kind: input, shape index: {}]
  %s10 = inlined_call_operand.vmem [shape: f32[128,8], index: 10, kind: input, shape index: {}]
  %s11 = inlined_call_operand.vmem [shape: f32[8,128], index: 11, kind: input, shape index: {}]
  %s12 = inlined_call_operand.hbm [shape: f32[32,128], index: 12, kind: output, shape index: {}]
  %s13 = sld [smem:[#allocation0]]
  $region66: #{tpu_custom_call.1} parent=0
    _
  %s15 = ssub.s32 1, %s13
  %s16 = scalar_select 0, %s15, %s13
  $region1: #{tpu_custom_call.1} parent=0
    #allocation2 [shape = 'u8[16384]{0}', space=vmem, size = 0x4000, scoped, tag = 'input window, operand 0, single buffered']
    #allocation3 [shape = 's32[1]{0}', space=sflag, size = 0x4, scoped, tag = 'scoped memory for tpu_custom_call.1']
    #allocation4 [shape = 's32[1]{0}', space=sflag, size = 0x4, scoped, tag = 'scoped memory for tpu_custom_call.1']
    #allocation5 [shape = 'u8[98304]{0}', space=vmem, size = 0x18000, scoped, tag = 'input window, operand 5, single buffered']
    #allocation6 [shape = 's32[1]{0}', space=sflag, size = 0x4, scoped, tag = 'scoped memory for tpu_custom_call.1']
    #allocation7 [shape = 'u8[16384]{0}', space=vmem, size = 0x4000, scoped, tag = 'output window, operand 0, single buffered']
    %17 = vsyncpa [#allocation3], 0
    %18 = vsyncpa [#allocation6], 0
    %19 = vsyncpa [#allocation4], 0
    // Predicated region
    $region2: #{tpu_custom_call.1} parent=1 // pred_check
      _
    $region3: #{tpu_custom_call.1} parent=1 // pred_check_branch
      %21 = sbr.rel (0) target = $region5
    $region4: #{tpu_custom_call.1} parent=1 // pred_region
      %s23 = ssub.s32 512, 512
      %24 = vsyncadd [#allocation3], %s23
      %s25 = sshll.u32 [#allocation2], 4
      %s26 = int_to_ptr.vmem [resolvable:$true] %s25
      %31 = dma.hbm_to_vmem [thread:$0]  %s0, 512, %s26, [#allocation3], 128, 128, 8
    $region5: #{tpu_custom_call.1} parent=1 // pred_fallthru
      _
    // Predicated region
    $region6: #{tpu_custom_call.1} parent=1 // pred_check
      _
    $region7: #{tpu_custom_call.1} parent=1 // pred_check_branch
      %33 = sbr.rel (0) target = $region9
    $region8: #{tpu_custom_call.1} parent=1 // pred_region
      _
    $region9: #{tpu_custom_call.1} parent=1 // pred_fallthru
      _
    // Predicated region
    $region10: #{tpu_custom_call.1} parent=1 // pred_check
      _
    $region11: #{tpu_custom_call.1} parent=1 // pred_check_branch
      %35 = sbr.rel (0) target = $region13
    $region12: #{tpu_custom_call.1} parent=1 // pred_region
      _
    $region13: #{tpu_custom_call.1} parent=1 // pred_fallthru
      _
    // Predicated region
    $region14: #{tpu_custom_call.1} parent=1 // pred_check
      _
    $region15: #{tpu_custom_call.1} parent=1 // pred_check_branch
      %37 = sbr.rel (0) target = $region17
    $region16: #{tpu_custom_call.1} parent=1 // pred_region
      _
    $region17: #{tpu_custom_call.1} parent=1 // pred_fallthru
      _
    // Predicated region
    $region18: #{tpu_custom_call.1} parent=1 // pred_check
      _
    $region19: #{tpu_custom_call.1} parent=1 // pred_check_branch
      %39 = sbr.rel (0) target = $region21
    $region20: #{tpu_custom_call.1} parent=1 // pred_region
      _
    $region21: #{tpu_custom_call.1} parent=1 // pred_fallthru
      _
    // Predicated region
    $region22: #{tpu_custom_call.1} parent=1 // pred_check
      _
    $region23: #{tpu_custom_call.1} parent=1 // pred_check_branch
      %41 = sbr.rel (0) target = $region25
    $region24: #{tpu_custom_call.1} parent=1 // pred_region
      %s43 = ssub.s32 3072, 3072
      %44 = vsyncadd [#allocation6], %s43
      %s45 = sshll.u32 [#allocation5], 4
      %s46 = int_to_ptr.vmem [resolvable:$true] %s45
      %51 = dma.hbm_to_vmem [thread:$0]  %s5, 3072, %s46, [#allocation6], 64, 64, 4
    $region25: #{tpu_custom_call.1} parent=1 // pred_fallthru
      _
    // Predicated region
    $region26: #{tpu_custom_call.1} parent=1 // pred_check
      _
    $region27: #{tpu_custom_call.1} parent=1 // pred_check_branch
      %53 = sbr.rel (0) target = $region29
    $region28: #{tpu_custom_call.1} parent=1 // pred_region
      _
    $region29: #{tpu_custom_call.1} parent=1 // pred_fallthru
      _
    // Predicated region
    $region30: #{tpu_custom_call.1} parent=1 // pred_check
      _
    $region31: #{tpu_custom_call.1} parent=1 // pred_check_branch
      %55 = sbr.rel (0) target = $region33
    $region32: #{tpu_custom_call.1} parent=1 // pred_region
      _
    $region33: #{tpu_custom_call.1} parent=1 // pred_fallthru
      _
    // Predicated region
    $region34: #{tpu_custom_call.1} parent=1 // pred_check
      _
    $region35: #{tpu_custom_call.1} parent=1 // pred_check_branch
      %57 = sbr.rel (0) target = $region37
    $region36: #{tpu_custom_call.1} parent=1 // pred_region
      _
    $region37: #{tpu_custom_call.1} parent=1 // pred_fallthru
      _
    // Predicated region
    $region38: #{tpu_custom_call.1} parent=1 // pred_check
      _
    $region39: #{tpu_custom_call.1} parent=1 // pred_check_branch
      %59 = sbr.rel (0) target = $region41
    $region40: #{tpu_custom_call.1} parent=1 // pred_region
      _
    $region41: #{tpu_custom_call.1} parent=1 // pred_fallthru
      _
    // Predicated region
    $region42: #{tpu_custom_call.1} parent=1 // pred_check
      _
    $region43: #{tpu_custom_call.1} parent=1 // pred_check_branch
      %61 = sbr.rel (0) target = $region45
    $region44: #{tpu_custom_call.1} parent=1 // pred_region
      _
    $region45: #{tpu_custom_call.1} parent=1 // pred_fallthru
      _
    // Predicated region
    $region46: #{tpu_custom_call.1} parent=1 // pred_check
      _
    $region47: #{tpu_custom_call.1} parent=1 // pred_check_branch
      %63 = sbr.rel (0) target = $region49
    $region48: #{tpu_custom_call.1} parent=1 // pred_region
      _
    $region49: #{tpu_custom_call.1} parent=1 // pred_fallthru
      _
    // Predicated region
    $region50: #{tpu_custom_call.1} parent=1 // pred_check
      _
    $region51: #{tpu_custom_call.1} parent=1 // pred_check_branch
      %65 = sbr.rel (0) target = $region53
    $region52: #{tpu_custom_call.1} parent=1 // pred_region
      %66 = dma.done [#allocation3], 512
    $region53: #{tpu_custom_call.1} parent=1 // pred_fallthru
      _
    // Predicated region
    $region54: #{tpu_custom_call.1} parent=1 // pred_check
      _
    $region55: #{tpu_custom_call.1} parent=1 // pred_check_branch
      %68 = sbr.rel (0) target = $region57
    $region56: #{tpu_custom_call.1} parent=1 // pred_region
      %69 = dma.done [#allocation6], 3072
    $region57: #{tpu_custom_call.1} parent=1 // pred_fallthru
      _
    %v71 = vlaneseq
    %v72 = vshrl.u32 %v71, 7
    %v73 = vadd.s32 %v72, 8
    %v74 = vadd.s32 %v72, 16
    %v75 = vadd.s32 %v72, 24
    %vm76 = vcmp.lt.s32.totalorder %v72, 0
    %v77 = vsub.s32 0, %v72
    %v78 = vsel %vm76, %v77, %v72
    %v79 = vshrl.u32 %v78, 4
    %v80 = vand.u32 %v78, 15
    %v81 = vsub.s32 0, %v80
    %v82 = vsel %vm76, %v81, %v80
    %vm83 = vcmp.lt.s32.totalorder %v73, 0
    %v84 = vsub.s32 0, %v73
    %v85 = vsel %vm83, %v84, %v73
    %v86 = vshrl.u32 %v85, 4
    %v87 = vand.u32 %v85, 15
    %v88 = vsub.s32 0, %v87
    %v89 = vsel %vm83, %v88, %v87
    %vm90 = vcmp.lt.s32.totalorder %v74, 0
    %v91 = vsub.s32 0, %v74
    %v92 = vsel %vm90, %v91, %v74
    %v93 = vshrl.u32 %v92, 4
    %v94 = vand.u32 %v92, 15
    %v95 = vsub.s32 0, %v94
    %v96 = vsel %vm90, %v95, %v94
    %vm97 = vcmp.lt.s32.totalorder %v75, 0
    %v98 = vsub.s32 0, %v75
    %v99 = vsel %vm97, %v98, %v75
    %v100 = vshrl.u32 %v99, 4
    %v101 = vand.u32 %v99, 15
    %v102 = vsub.s32 0, %v101
    %v103 = vsel %vm97, %v102, %v101
    %vm104 = vcmp.ne.s32.totalorder %v82, 0
    %vm105 = vcmp.ne.s32.totalorder %v89, 0
    %vm106 = vcmp.ne.s32.totalorder %v96, 0
    %vm107 = vcmp.ne.s32.totalorder %v103, 0
    %vm108 = vcmp.lt.s32.totalorder %v82, 0
    %vm109 = vcmp.lt.s32.totalorder %v89, 0
    %vm110 = vcmp.lt.s32.totalorder %v96, 0
    %vm111 = vcmp.lt.s32.totalorder %v103, 0
    %vm112 = vmand %vm108, %vm104
    %vm113 = vmand %vm109, %vm105
    %vm114 = vmand %vm110, %vm106
    %vm115 = vmand %vm111, %vm107
    %v116 = vadd.s32 %v82, 16
    %v117 = vadd.s32 %v89, 16
    %v118 = vadd.s32 %v96, 16
    %v119 = vadd.s32 %v103, 16
    %v120 = vsel %vm112, %v116, %v82
    %v121 = vsel %vm113, %v117, %v89
    %v122 = vsel %vm114, %v118, %v96
    %v123 = vsel %vm115, %v119, %v103
    %vm124 = vcmp.ge.s32.totalorder %v120, 1
    %vm125 = vcmp.ge.s32.totalorder %v121, 1
    %vm126 = vcmp.ge.s32.totalorder %v122, 1
    %vm127 = vcmp.ge.s32.totalorder %v123, 1
    %v128 = vsel %vm124, 1, 0
    %v129 = vsel %vm125, 1, 0
    %v130 = vsel %vm126, 1, 0
    %v131 = vsel %vm127, 1, 0
    %v132 = vcvt.s32.f32 %v128
    %v133 = vcvt.s32.f32 %v129
    %v134 = vcvt.s32.f32 %v130
    %v135 = vcvt.s32.f32 %v131
    %vm136 = vcmp.le.s32.totalorder %v120, 14
    %vm137 = vcmp.le.s32.totalorder %v121, 14
    %vm138 = vcmp.le.s32.totalorder %v122, 14
    %vm139 = vcmp.le.s32.totalorder %v123, 14
    %v140 = vsel %vm136, 1, 0
    %v141 = vsel %vm137, 1, 0
    %v142 = vsel %vm138, 1, 0
    %v143 = vsel %vm139, 1, 0
    %v144 = vcvt.s32.f32 %v140
    %v145 = vcvt.s32.f32 %v141
    %v146 = vcvt.s32.f32 %v142
    %v147 = vcvt.s32.f32 %v143
    %v148 = vld [vmem:[#allocation2] sm:$0xff]
    %v149 = vld [vmem:[#allocation2 + $0x8] sm:$0xff]
    %v150 = vld [vmem:[#allocation2 + $0x10] sm:$0xff]
    %v151 = vld [vmem:[#allocation2 + $0x18] sm:$0xff]
    %v152 = vrot.slane %v148, 7
    %v153 = vrot.slane %v149, 7
    %v154 = vrot.slane %v150, 7
    %v155 = vrot.slane %v151, 7
    %vm156 = vcmp.lt.s32.totalorder %v72, 1
    %v157 = vsel %vm156, %v154, %v155
    %v158 = vsel %vm156, %v153, %v154
    %v159 = vsel %vm156, %v152, %v153
    %v160 = vsel %vm156, %v155, %v152
    %v161 = vmul.f32 %v160, %v132
    %v162 = vmul.f32 %v159, %v133
    %v163 = vmul.f32 %v158, %v134
    %v164 = vmul.f32 %v157, %v135
    %v165 = vrot.slane %v148, 1
    %v166 = vrot.slane %v149, 1
    %v167 = vrot.slane %v150, 1
    %v168 = vrot.slane %v151, 1
    %vm169 = vcmp.lt.s32.totalorder %v72, 7
    %v170 = vsel %vm169, %v167, %v168
    %v171 = vsel %vm169, %v166, %v167
    %v172 = vsel %vm169, %v165, %v166
    %v173 = vsel %vm169, %v168, %v165
    %v174 = vmul.f32 %v172, %v144
    %v175 = vmul.f32 %v171, %v145
    %v176 = vmul.f32 %v170, %v146
    %v177 = vmul.f32 %v173, %v147
    %v178 = vpack.c.bf16 %v162, %v161
    %v179 = vpack.c.bf16 %v164, %v163
    %v180 = vpack.c.bf16 %v175, %v174
    %v181 = vpack.c.bf16 %v177, %v176
    %v182 = vpack.c.bf16 %v149, %v148
    %v183 = vpack.c.bf16 %v151, %v150
    %v184 = vld [vmem:[%s1] sm:$0xff]
    %v185 = vld [vmem:[%s1 + $0x8] sm:$0xff]
    %v186 = vld [vmem:[%s1 + $0x10] sm:$0xff]
    %v187 = vld [vmem:[%s1 + $0x18] sm:$0xff]
    %v188 = vld [vmem:[%s1 + $0x20] sm:$0xff]
    %v189 = vld [vmem:[%s1 + $0x28] sm:$0xff]
    %v190 = vld [vmem:[%s1 + $0x30] sm:$0xff]
    %v191 = vld [vmem:[%s1 + $0x38] sm:$0xff]
    %v200 = vunpack.c.l.b16 %v184
    %v201 = vunpack.c.h.b16 %v184
    %v202 = vunpack.c.l.b16 %v185
    %v203 = vunpack.c.h.b16 %v185
    %v204 = vunpack.c.l.b16 %v186
    %v205 = vunpack.c.h.b16 %v186
    %v206 = vunpack.c.l.b16 %v187
    %v207 = vunpack.c.h.b16 %v187
    %v208 = vunpack.c.l.b16 %v188
    %v209 = vunpack.c.h.b16 %v188
    %v210 = vunpack.c.l.b16 %v189
    %v211 = vunpack.c.h.b16 %v189
    %v212 = vunpack.c.l.b16 %v190
    %v213 = vunpack.c.h.b16 %v190
    %v214 = vunpack.c.l.b16 %v191
    %v215 = vunpack.c.h.b16 %v191
    %v216 = vpack.c.b16 %v202, %v200
    %v217 = vpack.c.b16 %v203, %v201
    %v218 = vpack.c.b16 %v206, %v204
    %v219 = vpack.c.b16 %v207, %v205
    %v220 = vpack.c.b16 %v210, %v208
    %v221 = vpack.c.b16 %v211, %v209
    %v222 = vpack.c.b16 %v214, %v212
    %v223 = vpack.c.b16 %v215, %v213
    %vm232 = vcmask 523264
    %v234 = vsel %vm232, %v182, 0
    %v237 = vsel %vm232, %v183, 0
    %239 = vmatprep.subr.bf16.mxu0 %v217
    %240 = vmatpush1.bf16.msra.mxu0 %v216
    %241 = vmatprep.subr.bf16.mxu0 %v219
    %242 = vmatpush1.bf16.msra.mxu0 %v218
    %243 = vmatprep.subr.bf16.mxu0 %v221
    %244 = vmatpush1.bf16.msra.mxu0 %v220
    %245 = vmatprep.subr.bf16.mxu0 %v223
    %246 = vmatpush1.bf16.msra.mxu0 %v222
    %247 = vmatprep.subr.bf16.mxu0 0
    %248 = vmatpush1.bf16.msra.mxu0 0
    %249 = vmatprep.subr.bf16.mxu0 0
    %250 = vmatpush1.bf16.msra.mxu0 0
    %251 = vmatprep.subr.bf16.mxu0 0
    %252 = vmatpush1.bf16.msra.mxu0 0
    %253 = vmatprep.subr.bf16.mxu0 0
    %254 = vmatpush1.bf16.msra.mxu0 0
    %255 = vmatprep.subr.bf16.mxu0 0
    %256 = vmatpush1.bf16.msra.mxu0 0
    %257 = vmatprep.subr.bf16.mxu0 0
    %258 = vmatpush1.bf16.msra.mxu0 0
    %259 = vmatprep.subr.bf16.mxu0 0
    %260 = vmatpush1.bf16.msra.mxu0 0
    %261 = vmatprep.subr.bf16.mxu0 0
    %262 = vmatpush1.bf16.msra.mxu0 0
    %263 = vmatprep.subr.bf16.mxu0 0
    %264 = vmatpush1.bf16.msra.mxu0 0
    %265 = vmatprep.subr.bf16.mxu0 0
    %266 = vmatpush1.bf16.msra.mxu0 0
    %267 = vmatprep.subr.bf16.mxu0 0
    %268 = vmatpush1.bf16.msra.mxu0 0
    %269 = vmatprep.subr.bf16.mxu0 0
    %270 = vmatpush1.bf16.msra.mxu0 0
    %271 = vmatprep.mubr.bf16.mxu0 0
    %272 = vmatmul.mubr.bf16.gmra.mrb[0].mxu0 %v234
    %v273 = vpop.f32.mrb[0].mxu0
    %v274 = vadd.f32 0.0, %v273
    %v275 = vpop.f32.mrb[0].mxu0
    %v276 = vadd.f32 0.0, %v275
    %v277 = vpop.f32.mrb[0].mxu0
    %v278 = vadd.f32 0.0, %v277
    %v279 = vpop.f32.mrb[0].mxu0
    %v280 = vadd.f32 0.0, %v279
    %281 = vmatprep.mubr.bf16.mxu0 0
    %282 = vmatmul.mubr.bf16.gmra.mrb[0].mxu0 %v237
    %v283 = vpop.f32.mrb[0].mxu0
    %v284 = vadd.f32 0.0, %v283
    %v285 = vpop.f32.mrb[0].mxu0
    %v286 = vadd.f32 0.0, %v285
    %v287 = vpop.f32.mrb[0].mxu0
    %v288 = vadd.f32 0.0, %v287
    %v289 = vpop.f32.mrb[0].mxu0
    %v290 = vadd.f32 0.0, %v289
    %291 = vdwg.mxu0
    %v292 = vld [vmem:[%s2] sm:$0xf]
    %v293 = vld [vmem:[%s2 + $0x4] sm:$0xf]
    %v294 = vld [vmem:[%s2 + $0x8] sm:$0xf]
    %v295 = vld [vmem:[%s2 + $0xc] sm:$0xf]
    %v296 = vld [vmem:[%s2 + $0x10] sm:$0xf]
    %v297 = vld [vmem:[%s2 + $0x14] sm:$0xf]
    %v298 = vld [vmem:[%s2 + $0x18] sm:$0xf]
    %v299 = vld [vmem:[%s2 + $0x1c] sm:$0xf]
    %v308 = vunpack.c.l.b16 %v292
    %v309 = vunpack.c.l.b16 %v293
    %v310 = vunpack.c.l.b16 %v294
    %v311 = vunpack.c.l.b16 %v295
    %v312 = vunpack.c.l.b16 %v296
    %v313 = vunpack.c.l.b16 %v297
    %v314 = vunpack.c.l.b16 %v298
    %v315 = vunpack.c.l.b16 %v299
    %v316 = vpack.c.b16 %v309, %v308
    %v317 = vpack.c.b16 %v311, %v310
    %v318 = vpack.c.b16 %v313, %v312
    %v319 = vpack.c.b16 %v315, %v314
    %v325 = vsel %vm232, %v178, 0
    %v328 = vsel %vm232, %v179, 0
    %330 = vmatprep.subr.bf16.mxu0 0
    %331 = vmatpush1.bf16.msra.mxu0 %v316
    %332 = vmatprep.subr.bf16.mxu0 0
    %333 = vmatpush1.bf16.msra.mxu0 %v317
    %334 = vmatprep.subr.bf16.mxu0 0
    %335 = vmatpush1.bf16.msra.mxu0 %v318
    %336 = vmatprep.subr.bf16.mxu0 0
    %337 = vmatpush1.bf16.msra.mxu0 %v319
    %338 = vmatprep.subr.bf16.mxu0 0
    %339 = vmatpush1.bf16.msra.mxu0 0
    %340 = vmatprep.subr.bf16.mxu0 0
    %341 = vmatpush1.bf16.msra.mxu0 0
    %342 = vmatprep.subr.bf16.mxu0 0
    %343 = vmatpush1.bf16.msra.mxu0 0
    %344 = vmatprep.subr.bf16.mxu0 0
    %345 = vmatpush1.bf16.msra.mxu0 0
    %346 = vmatprep.subr.bf16.mxu0 0
    %347 = vmatpush1.bf16.msra.mxu0 0
    %348 = vmatprep.subr.bf16.mxu0 0
    %349 = vmatpush1.bf16.msra.mxu0 0
    %350 = vmatprep.subr.bf16.mxu0 0
    %351 = vmatpush1.bf16.msra.mxu0 0
    %352 = vmatprep.subr.bf16.mxu0 0
    %353 = vmatpush1.bf16.msra.mxu0 0
    %354 = vmatprep.subr.bf16.mxu0 0
    %355 = vmatpush1.bf16.msra.mxu0 0
    %356 = vmatprep.subr.bf16.mxu0 0
    %357 = vmatpush1.bf16.msra.mxu0 0
    %358 = vmatprep.subr.bf16.mxu0 0
    %359 = vmatpush1.bf16.msra.mxu0 0
    %360 = vmatprep.subr.bf16.mxu0 0
    %361 = vmatpush1.bf16.msra.mxu0 0
    %362 = vmatprep.mubr.bf16.mxu0 0
    %363 = vmatmul.mubr.bf16.gmra.mrb[0].mxu0 %v325
    %v364 = vpop.f32.mrb[0].mxu0
    %v365 = vadd.f32 0.0, %v364
    %v366 = vpop.f32.mrb[0].mxu0
    %v367 = vpop.f32.mrb[0].mxu0
    %v368 = vadd.f32 0.0, %v367
    %v369 = vpop.f32.mrb[0].mxu0
    %370 = vmatprep.mubr.bf16.mxu0 0
    %371 = vmatmul.mubr.bf16.gmra.mrb[0].mxu0 %v328
    %v372 = vpop.f32.mrb[0].mxu0
    %v373 = vadd.f32 0.0, %v372
    %v374 = vpop.f32.mrb[0].mxu0
    %v375 = vpop.f32.mrb[0].mxu0
    %v376 = vadd.f32 0.0, %v375
    %v377 = vpop.f32.mrb[0].mxu0
    %378 = vdwg.mxu0
    %v379 = vadd.f32 %v274, %v365
    %v380 = vadd.f32 %v278, %v368
    %v381 = vadd.f32 %v284, %v373
    %v382 = vadd.f32 %v288, %v376
    %v383 = vld [vmem:[%s2 + $0x20] sm:$0xf]
    %v384 = vld [vmem:[%s2 + $0x24] sm:$0xf]
    %v385 = vld [vmem:[%s2 + $0x28] sm:$0xf]
    %v386 = vld [vmem:[%s2 + $0x2c] sm:$0xf]
    %v387 = vld [vmem:[%s2 + $0x30] sm:$0xf]
    %v388 = vld [vmem:[%s2 + $0x34] sm:$0xf]
    %v389 = vld [vmem:[%s2 + $0x38] sm:$0xf]
    %v390 = vld [vmem:[%s2 + $0x3c] sm:$0xf]
    %v399 = vunpack.c.l.b16 %v383
    %v400 = vunpack.c.l.b16 %v384
    %v401 = vunpack.c.l.b16 %v385
    %v402 = vunpack.c.l.b16 %v386
    %v403 = vunpack.c.l.b16 %v387
    %v404 = vunpack.c.l.b16 %v388
    %v405 = vunpack.c.l.b16 %v389
    %v406 = vunpack.c.l.b16 %v390
    %v407 = vpack.c.b16 %v400, %v399
    %v408 = vpack.c.b16 %v402, %v401
    %v409 = vpack.c.b16 %v404, %v403
    %v410 = vpack.c.b16 %v406, %v405
    %v416 = vsel %vm232, %v180, 0
    %v419 = vsel %vm232, %v181, 0
    %421 = vmatprep.subr.bf16.mxu0 0
    %422 = vmatpush1.bf16.msra.mxu0 %v407
    %423 = vmatprep.subr.bf16.mxu0 0
    %424 = vmatpush1.bf16.msra.mxu0 %v408
    %425 = vmatprep.subr.bf16.mxu0 0
    %426 = vmatpush1.bf16.msra.mxu0 %v409
    %427 = vmatprep.subr.bf16.mxu0 0
    %428 = vmatpush1.bf16.msra.mxu0 %v410
    %429 = vmatprep.subr.bf16.mxu0 0
    %430 = vmatpush1.bf16.msra.mxu0 0
    %431 = vmatprep.subr.bf16.mxu0 0
    %432 = vmatpush1.bf16.msra.mxu0 0
    %433 = vmatprep.subr.bf16.mxu0 0
    %434 = vmatpush1.bf16.msra.mxu0 0
    %435 = vmatprep.subr.bf16.mxu0 0
    %436 = vmatpush1.bf16.msra.mxu0 0
    %437 = vmatprep.subr.bf16.mxu0 0
    %438 = vmatpush1.bf16.msra.mxu0 0
    %439 = vmatprep.subr.bf16.mxu0 0
    %440 = vmatpush1.bf16.msra.mxu0 0
    %441 = vmatprep.subr.bf16.mxu0 0
    %442 = vmatpush1.bf16.msra.mxu0 0
    %443 = vmatprep.subr.bf16.mxu0 0
    %444 = vmatpush1.bf16.msra.mxu0 0
    %445 = vmatprep.subr.bf16.mxu0 0
    %446 = vmatpush1.bf16.msra.mxu0 0
    %447 = vmatprep.subr.bf16.mxu0 0
    %448 = vmatpush1.bf16.msra.mxu0 0
    %449 = vmatprep.subr.bf16.mxu0 0
    %450 = vmatpush1.bf16.msra.mxu0 0
    %451 = vmatprep.subr.bf16.mxu0 0
    %452 = vmatpush1.bf16.msra.mxu0 0
    %453 = vmatprep.mubr.bf16.mxu0 0
    %454 = vmatmul.mubr.bf16.gmra.mrb[0].mxu0 %v416
    %v455 = vpop.f32.mrb[0].mxu0
    %v456 = vadd.f32 0.0, %v455
    %v457 = vpop.f32.mrb[0].mxu0
    %v458 = vpop.f32.mrb[0].mxu0
    %v459 = vadd.f32 0.0, %v458
    %v460 = vpop.f32.mrb[0].mxu0
    %461 = vmatprep.mubr.bf16.mxu0 0
    %462 = vmatmul.mubr.bf16.gmra.mrb[0].mxu0 %v419
    %v463 = vpop.f32.mrb[0].mxu0
    %v464 = vadd.f32 0.0, %v463
    %v465 = vpop.f32.mrb[0].mxu0
    %v466 = vpop.f32.mrb[0].mxu0
    %v467 = vadd.f32 0.0, %v466
    %v468 = vpop.f32.mrb[0].mxu0
    %469 = vdwg.mxu0
    %v470 = vadd.f32 %v379, %v456
    %v471 = vadd.f32 %v380, %v459
    %v472 = vadd.f32 %v381, %v464
    %v473 = vadd.f32 %v382, %v467
    %v474 = vadd.f32 %v470, %v471
    %v475 = vadd.f32 %v474, %v472
    %v476 = vadd.f32 %v475, %v473
    %v477 = vrot.slane %v476, 4
    %v478 = vadd.f32 %v476, %v477
    %v479 = vrot.slane %v478, 2
    %v480 = vadd.f32 %v478, %v479
    %v481 = vrot.slane %v480, 1
    %v482 = vadd.f32 %v480, %v481
    %v483 = vmul.f32 %v470, %v470
    %v484 = vmul.f32 %v471, %v471
    %v485 = vmul.f32 %v472, %v472
    %v486 = vmul.f32 %v473, %v473
    %v487 = vadd.f32 %v483, %v484
    %v488 = vadd.f32 %v487, %v485
    %v489 = vadd.f32 %v488, %v486
    %v490 = vrot.slane %v489, 4
    %v491 = vadd.f32 %v489, %v490
    %v492 = vrot.slane %v491, 2
    %v493 = vadd.f32 %v491, %v492
    %v494 = vrot.slane %v493, 1
    %v495 = vadd.f32 %v493, %v494
    %v496 = vadd.f32 %v276, %v280
    %v497 = vadd.f32 %v496, %v286
    %v498 = vadd.f32 %v497, %v290
    %v499 = vrot.slane %v498, 4
    %v500 = vadd.f32 %v498, %v499
    %v501 = vrot.slane %v500, 2
    %v502 = vadd.f32 %v500, %v501
    %v503 = vrot.slane %v502, 1
    %v504 = vadd.f32 %v502, %v503
    %v505 = vmul.f32 %v276, %v276
    %v506 = vmul.f32 %v280, %v280
    %v507 = vmul.f32 %v286, %v286
    %v508 = vmul.f32 %v290, %v290
    %v509 = vadd.f32 %v505, %v506
    %v510 = vadd.f32 %v509, %v507
    %v511 = vadd.f32 %v510, %v508
    %v512 = vrot.slane %v511, 4
    %v513 = vadd.f32 %v511, %v512
    %v514 = vrot.slane %v513, 2
    %v515 = vadd.f32 %v513, %v514
    %v516 = vrot.slane %v515, 1
    %v517 = vadd.f32 %v515, %v516
    %vm518 = vcmask 1040384
    %v519 = vsel %vm518, %v482, %v495
    %vm520 = vcmask 1041408
    %v521 = vsel %vm520, %v519, %v504
    %vm522 = vcmask 1042432
    %v523 = vsel %vm522, %v521, %v517
    %v524 = vld [vmem:[%s10] sm:$0xff]
    %v525 = vld [vmem:[%s10 + $0x8] sm:$0xff]
    %v526 = vld [vmem:[%s10 + $0x10] sm:$0xff]
    %v527 = vld [vmem:[%s10 + $0x18] sm:$0xff]
    %v528 = vld [vmem:[%s10 + $0x20] sm:$0xff]
    %v529 = vld [vmem:[%s10 + $0x28] sm:$0xff]
    %v530 = vld [vmem:[%s10 + $0x30] sm:$0xff]
    %v531 = vld [vmem:[%s10 + $0x38] sm:$0xff]
    %v532 = vld [vmem:[%s10 + $0x40] sm:$0xff]
    %v533 = vld [vmem:[%s10 + $0x48] sm:$0xff]
    %v534 = vld [vmem:[%s10 + $0x50] sm:$0xff]
    %v535 = vld [vmem:[%s10 + $0x58] sm:$0xff]
    %v536 = vld [vmem:[%s10 + $0x60] sm:$0xff]
    %v537 = vld [vmem:[%s10 + $0x68] sm:$0xff]
    %v538 = vld [vmem:[%s10 + $0x70] sm:$0xff]
    %v539 = vld [vmem:[%s10 + $0x78] sm:$0xff]
    %540 = vmatprep.subr.mxu0 0.0
    %541 = vmatpush1.msra.mxu0 %v524
    %542 = vmatprep.subr.mxu0 0.0
    %543 = vmatpush1.msra.mxu0 %v525
    %544 = vmatprep.subr.mxu0 0.0
    %545 = vmatpush1.msra.mxu0 %v526
    %546 = vmatprep.subr.mxu0 0.0
    %547 = vmatpush1.msra.mxu0 %v527
    %548 = vmatprep.subr.mxu0 0.0
    %549 = vmatpush1.msra.mxu0 %v528
    %550 = vmatprep.subr.mxu0 0.0
    %551 = vmatpush1.msra.mxu0 %v529
    %552 = vmatprep.subr.mxu0 0.0
    %553 = vmatpush1.msra.mxu0 %v530
    %554 = vmatprep.subr.mxu0 0.0
    %555 = vmatpush1.msra.mxu0 %v531
    %556 = vmatprep.subr.mxu0 0.0
    %557 = vmatpush1.msra.mxu0 %v532
    %558 = vmatprep.subr.mxu0 0.0
    %559 = vmatpush1.msra.mxu0 %v533
    %560 = vmatprep.subr.mxu0 0.0
    %561 = vmatpush1.msra.mxu0 %v534
    %562 = vmatprep.subr.mxu0 0.0
    %563 = vmatpush1.msra.mxu0 %v535
    %564 = vmatprep.subr.mxu0 0.0
    %565 = vmatpush1.msra.mxu0 %v536
    %566 = vmatprep.subr.mxu0 0.0
    %567 = vmatpush1.msra.mxu0 %v537
    %568 = vmatprep.subr.mxu0 0.0
    %569 = vmatpush1.msra.mxu0 %v538
    %570 = vmatprep.subr.mxu0 0.0
    %571 = vmatpush1.msra.mxu0 %v539
    %572 = vmatprep.subr.mxu0 0.0
    %573 = vmatpush1.msra.mxu0 0.0
    %574 = vmatprep.subr.mxu0 0.0
    %575 = vmatpush1.msra.mxu0 0.0
    %576 = vmatprep.subr.mxu0 0.0
    %577 = vmatpush1.msra.mxu0 0.0
    %578 = vmatprep.subr.mxu0 0.0
    %579 = vmatpush1.msra.mxu0 0.0
    %580 = vmatprep.subr.mxu0 0.0
    %581 = vmatpush1.msra.mxu0 0.0
    %582 = vmatprep.subr.mxu0 0.0
    %583 = vmatpush1.msra.mxu0 0.0
    %584 = vmatprep.subr.mxu0 0.0
    %585 = vmatpush1.msra.mxu0 0.0
    %586 = vmatprep.subr.mxu0 0.0
    %587 = vmatpush1.msra.mxu0 0.0
    %588 = vmatprep.subr.mxu0 0.0
    %589 = vmatpush1.msra.mxu0 0.0
    %590 = vmatprep.subr.mxu0 0.0
    %591 = vmatpush1.msra.mxu0 0.0
    %592 = vmatprep.subr.mxu0 0.0
    %593 = vmatpush1.msra.mxu0 0.0
    %594 = vmatprep.subr.mxu0 0.0
    %595 = vmatpush1.msra.mxu0 0.0
    %596 = vmatprep.subr.mxu0 0.0
    %597 = vmatpush1.msra.mxu0 0.0
    %598 = vmatprep.subr.mxu0 0.0
    %599 = vmatpush1.msra.mxu0 0.0
    %600 = vmatprep.subr.mxu0 0.0
    %601 = vmatpush1.msra.mxu0 0.0
    %602 = vmatprep.subr.mxu0 0.0
    %603 = vmatpush1.msra.mxu0 0.0
    %604 = vmatprep.mubr.f32.mxu0 0.0
    %605 = vmatmul.mubr.f32.gmra.mrb[0].mxu0 %v523
    %v606 = vpop.f32.mrb[0].mxu0
    %v607 = vadd.f32 0.0, %v606
    %v608 = vpop.f32.mrb[0].mxu0
    %609 = vdwg.mxu0
    %v610 = vrcp.pop 512.0
    %v611 = vmul.f32 %v607, %v610
    %v612 = vmul.f32 %v611, %v611
    %v614 = vrot.slane %v612, 7
    %v616 = vsub.f32 %v611, %v614
    %v617 = vld [vmem:[%s3] sm:$0x1]
    %v618 = vadd.f32 %v616, 1e-05
    %v619 = vrsqrt.pop %v618
    %v622 = vunpack.c.l.s4 1966171168
    %v623 = vunpack.c.0.s8 %v622
    %v624 = vlaneseq
    %v625 = vshrl.u32 %v624, 7
    %v626 = vsub.s32 %v623, %v625
    %v627 = vrot.slane %v619, %v626
    %v628 = vcombine.high %v627, %v627
    %v630 = vunpack.c.l.s4 1966171168
    %v631 = vunpack.c.0.s8 %v630
    %v632 = vlaneseq
    %v633 = vshrl.u32 %v632, 7
    %v634 = vsub.s32 %v631, %v633
    %v635 = vrot.slane %v628, %v634
    %v637 = vmul.f32 %v617, %v635
    %v638 = vld [vmem:[%s4] sm:$0x1]
    %v639 = vmul.f32 %v611, %v637
    %v640 = vsub.f32 %v638, %v639
    %v641 = vld [vmem:[%s8] sm:$0x1]
    %v642 = vcombine.high %v635, %v635
    %v644 = vmul.f32 %v641, %v642
    %v645 = vld [vmem:[%s9] sm:$0x1]
    %v647 = vlaneseq
    %v648 = vshrl.u32 %v647, 7
    %v649 = vsub.s32 0, %v648
    %v650 = vrot.slane %v644, %v649
    %v652 = vmul.f32 %v611, %v650
    %v655 = vunpack.c.l.s4 1966171168
    %v656 = vunpack.c.0.s8 %v655
    %v657 = vlaneseq
    %v658 = vshrl.u32 %v657, 7
    %v659 = vsub.s32 %v656, %v658
    %v660 = vrot.slane %v652, %v659
    %v662 = vunpack.c.l.s4 1966171168
    %v663 = vunpack.c.0.s8 %v662
    %v664 = vlaneseq
    %v665 = vshrl.u32 %v664, 7
    %v666 = vsub.s32 %v663, %v665
    %v667 = vrot.slane %v660, %v666
    %v668 = vcombine.high %v667, %v667
    %v670 = vsub.f32 %v645, %v668
    %v672 = vlaneseq
    %v673 = vshrl.u32 %v672, 7
    %v674 = vsub.s32 0, %v673
    %v675 = vrot.slane %v640, %v674
    %v678 = vlaneseq
    %v679 = vshrl.u32 %v678, 7
    %v680 = vsub.s32 0, %v679
    %v681 = vrot.slane %v670, %v680
    %v683 = vsel %vm518, %v637, %v675
    %v684 = vsel %vm520, %v683, %v650
    %v685 = vsel %vm522, %v684, %v681
    %v686 = vld [vmem:[%s11] sm:$0xff]
    %vm687 = vcmask 64512
    %v689 = vsel %vm687, %v685, 0
    %691 = vmatprep.subr.mxu0 0.0
    %692 = vmatpush1.msra.mxu0 %v686
    %693 = vmatprep.subr.mxu0 0.0
    %694 = vmatpush1.msra.mxu0 0.0
    %695 = vmatprep.subr.mxu0 0.0
    %696 = vmatpush1.msra.mxu0 0.0
    %697 = vmatprep.subr.mxu0 0.0
    %698 = vmatpush1.msra.mxu0 0.0
    %699 = vmatprep.subr.mxu0 0.0
    %700 = vmatpush1.msra.mxu0 0.0
    %701 = vmatprep.subr.mxu0 0.0
    %702 = vmatpush1.msra.mxu0 0.0
    %703 = vmatprep.subr.mxu0 0.0
    %704 = vmatpush1.msra.mxu0 0.0
    %705 = vmatprep.subr.mxu0 0.0
    %706 = vmatpush1.msra.mxu0 0.0
    %707 = vmatprep.subr.mxu0 0.0
    %708 = vmatpush1.msra.mxu0 0.0
    %709 = vmatprep.subr.mxu0 0.0
    %710 = vmatpush1.msra.mxu0 0.0
    %711 = vmatprep.subr.mxu0 0.0
    %712 = vmatpush1.msra.mxu0 0.0
    %713 = vmatprep.subr.mxu0 0.0
    %714 = vmatpush1.msra.mxu0 0.0
    %715 = vmatprep.subr.mxu0 0.0
    %716 = vmatpush1.msra.mxu0 0.0
    %717 = vmatprep.subr.mxu0 0.0
    %718 = vmatpush1.msra.mxu0 0.0
    %719 = vmatprep.subr.mxu0 0.0
    %720 = vmatpush1.msra.mxu0 0.0
    %721 = vmatprep.subr.mxu0 0.0
    %722 = vmatpush1.msra.mxu0 0.0
    %723 = vmatprep.subr.mxu0 0.0
    %724 = vmatpush1.msra.mxu0 0.0
    %725 = vmatprep.subr.mxu0 0.0
    %726 = vmatpush1.msra.mxu0 0.0
    %727 = vmatprep.subr.mxu0 0.0
    %728 = vmatpush1.msra.mxu0 0.0
    %729 = vmatprep.subr.mxu0 0.0
    %730 = vmatpush1.msra.mxu0 0.0
    %731 = vmatprep.subr.mxu0 0.0
    %732 = vmatpush1.msra.mxu0 0.0
    %733 = vmatprep.subr.mxu0 0.0
    %734 = vmatpush1.msra.mxu0 0.0
    %735 = vmatprep.subr.mxu0 0.0
    %736 = vmatpush1.msra.mxu0 0.0
    %737 = vmatprep.subr.mxu0 0.0
    %738 = vmatpush1.msra.mxu0 0.0
    %739 = vmatprep.subr.mxu0 0.0
    %740 = vmatpush1.msra.mxu0 0.0
    %741 = vmatprep.subr.mxu0 0.0
    %742 = vmatpush1.msra.mxu0 0.0
    %743 = vmatprep.subr.mxu0 0.0
    %744 = vmatpush1.msra.mxu0 0.0
    %745 = vmatprep.subr.mxu0 0.0
    %746 = vmatpush1.msra.mxu0 0.0
    %747 = vmatprep.subr.mxu0 0.0
    %748 = vmatpush1.msra.mxu0 0.0
    %749 = vmatprep.subr.mxu0 0.0
    %750 = vmatpush1.msra.mxu0 0.0
    %751 = vmatprep.subr.mxu0 0.0
    %752 = vmatpush1.msra.mxu0 0.0
    %753 = vmatprep.subr.mxu0 0.0
    %754 = vmatpush1.msra.mxu0 0.0
    %755 = vmatprep.mubr.f32.mxu0 0.0
    %756 = vmatmul.mubr.f32.gmra.mrb[0].mxu0 %v689
    %v757 = vpop.f32.mrb[0].mxu0
    %v758 = vadd.f32 0.0, %v757
    %v759 = vpop.f32.mrb[0].mxu0
    %760 = vdwg.mxu0
    %v761 = vlaneseq
    %v762 = vshrl.u32 %v761, 7
    %v763 = vsub.s32 0, %v762
    %v764 = vrot.slane %v758, %v763
    %v765 = vmul.f32 %v470, %v764
    %v766 = vmul.f32 %v471, %v764
    %v767 = vmul.f32 %v472, %v764
    %v768 = vmul.f32 %v473, %v764
    %v769 = vlaneseq
    %v770 = vshrl.u32 %v769, 7
    %v771 = vsub.s32 1, %v770
    %v772 = vrot.slane %v758, %v771
    %v773 = vadd.f32 %v765, %v772
    %v774 = vadd.f32 %v766, %v772
    %v775 = vadd.f32 %v767, %v772
    %v776 = vadd.f32 %v768, %v772
    %v777 = vmul.f32 %v773, 0.2
    %v778 = vmul.f32 %v774, 0.2
    %v779 = vmul.f32 %v775, 0.2
    %v780 = vmul.f32 %v776, 0.2
    %v781 = vmax.f32 %v773, %v777
    %v782 = vmax.f32 %v774, %v778
    %v783 = vmax.f32 %v775, %v779
    %v784 = vmax.f32 %v776, %v780
    %v785 = vlaneseq
    %v786 = vshrl.u32 %v785, 7
    %v787 = vsub.s32 2, %v786
    %v788 = vrot.slane %v758, %v787
    %v789 = vmul.f32 %v276, %v788
    %v790 = vmul.f32 %v280, %v788
    %v791 = vmul.f32 %v286, %v788
    %v792 = vmul.f32 %v290, %v788
    %v793 = vlaneseq
    %v794 = vshrl.u32 %v793, 7
    %v795 = vsub.s32 3, %v794
    %v796 = vrot.slane %v758, %v795
    %v797 = vadd.f32 %v789, %v796
    %v798 = vadd.f32 %v790, %v796
    %v799 = vadd.f32 %v791, %v796
    %v800 = vadd.f32 %v792, %v796
    %v801 = vrot.slane %v781, 7
    %v802 = vrot.slane %v782, 7
    %v803 = vrot.slane %v783, 7
    %v804 = vrot.slane %v784, 7
    %v805 = vsel %vm156, %v803, %v804
    %v806 = vsel %vm156, %v802, %v803
    %v807 = vsel %vm156, %v801, %v802
    %v808 = vsel %vm156, %v804, %v801
    %v809 = vmul.f32 %v808, %v132
    %v810 = vmul.f32 %v807, %v133
    %v811 = vmul.f32 %v806, %v134
    %v812 = vmul.f32 %v805, %v135
    %v813 = vrot.slane %v781, 1
    %v814 = vrot.slane %v782, 1
    %v815 = vrot.slane %v783, 1
    %v816 = vrot.slane %v784, 1
    %v817 = vsel %vm169, %v815, %v816
    %v818 = vsel %vm169, %v814, %v815
    %v819 = vsel %vm169, %v813, %v814
    %v820 = vsel %vm169, %v816, %v813
    %v821 = vmul.f32 %v819, %v144
    %v822 = vmul.f32 %v818, %v145
    %v823 = vmul.f32 %v817, %v146
    %v824 = vmul.f32 %v820, %v147
    %v825 = vpack.c.bf16 %v810, %v809
    %v826 = vpack.c.bf16 %v812, %v811
    %v827 = vpack.c.bf16 %v822, %v821
    %v828 = vpack.c.bf16 %v824, %v823
    %v829 = vpack.c.bf16 %v782, %v781
    %v830 = vpack.c.bf16 %v784, %v783
    %v831 = vld [vmem:[#allocation5] sm:$0xf]
    %v832 = vld [vmem:[#allocation5 + $0x4] sm:$0xf]
    %v833 = vld [vmem:[#allocation5 + $0x8] sm:$0xf]
    %v834 = vld [vmem:[#allocation5 + $0xc] sm:$0xf]
    %v835 = vld [vmem:[#allocation5 + $0x10] sm:$0xf]
    %v836 = vld [vmem:[#allocation5 + $0x14] sm:$0xf]
    %v837 = vld [vmem:[#allocation5 + $0x18] sm:$0xf]
    %v838 = vld [vmem:[#allocation5 + $0x1c] sm:$0xf]
    %v839 = vld [vmem:[#allocation5 + $0x20] sm:$0xf]
    %v840 = vld [vmem:[#allocation5 + $0x24] sm:$0xf]
    %v841 = vld [vmem:[#allocation5 + $0x28] sm:$0xf]
    %v842 = vld [vmem:[#allocation5 + $0x2c] sm:$0xf]
    %v843 = vld [vmem:[#allocation5 + $0x30] sm:$0xf]
    %v844 = vld [vmem:[#allocation5 + $0x34] sm:$0xf]
    %v845 = vld [vmem:[#allocation5 + $0x38] sm:$0xf]
    %v846 = vld [vmem:[#allocation5 + $0x3c] sm:$0xf]
    %v847 = vld [vmem:[#allocation5 + $0x40] sm:$0xf]
    %v848 = vld [vmem:[#allocation5 + $0x44] sm:$0xf]
    %v849 = vld [vmem:[#allocation5 + $0x48] sm:$0xf]
    %v850 = vld [vmem:[#allocation5 + $0x4c] sm:$0xf]
    %v851 = vld [vmem:[#allocation5 + $0x50] sm:$0xf]
    %v852 = vld [vmem:[#allocation5 + $0x54] sm:$0xf]
    %v853 = vld [vmem:[#allocation5 + $0x58] sm:$0xf]
    %v854 = vld [vmem:[#allocation5 + $0x5c] sm:$0xf]
    %v855 = vld [vmem:[#allocation5 + $0x60] sm:$0xf]
    %v856 = vld [vmem:[#allocation5 + $0x64] sm:$0xf]
    %v857 = vld [vmem:[#allocation5 + $0x68] sm:$0xf]
    %v858 = vld [vmem:[#allocation5 + $0x6c] sm:$0xf]
    %v859 = vld [vmem:[#allocation5 + $0x70] sm:$0xf]
    %v860 = vld [vmem:[#allocation5 + $0x74] sm:$0xf]
    %v861 = vld [vmem:[#allocation5 + $0x78] sm:$0xf]
    %v862 = vld [vmem:[#allocation5 + $0x7c] sm:$0xf]
    %v879 = vunpack.c.l.b16 %v847
    %v880 = vunpack.c.l.b16 %v848
    %v881 = vunpack.c.l.b16 %v849
    %v882 = vunpack.c.l.b16 %v850
    %v883 = vunpack.c.l.b16 %v851
    %v884 = vunpack.c.l.b16 %v852
    %v885 = vunpack.c.l.b16 %v853
    %v886 = vunpack.c.l.b16 %v854
    %v887 = vunpack.c.l.b16 %v855
    %v888 = vunpack.c.l.b16 %v856
    %v889 = vunpack.c.l.b16 %v857
    %v890 = vunpack.c.l.b16 %v858
    %v891 = vunpack.c.l.b16 %v859
    %v892 = vunpack.c.l.b16 %v860
    %v893 = vunpack.c.l.b16 %v861
    %v894 = vunpack.c.l.b16 %v862
    %v895 = vpack.c.b16 %v880, %v879
    %v896 = vpack.c.b16 %v882, %v881
    %v897 = vpack.c.b16 %v884, %v883
    %v898 = vpack.c.b16 %v886, %v885
    %v899 = vpack.c.b16 %v888, %v887
    %v900 = vpack.c.b16 %v890, %v889
    %v901 = vpack.c.b16 %v892, %v891
    %v902 = vpack.c.b16 %v894, %v893
    %911 = vmatprep.subr.bf16.mxu0 0
    %912 = vmatpush1.bf16.msra.mxu0 %v895
    %913 = vmatprep.subr.bf16.mxu0 0
    %914 = vmatpush1.bf16.msra.mxu0 %v896
    %915 = vmatprep.subr.bf16.mxu0 0
    %916 = vmatpush1.bf16.msra.mxu0 %v897
    %917 = vmatprep.subr.bf16.mxu0 0
    %918 = vmatpush1.bf16.msra.mxu0 %v898
    %919 = vmatprep.subr.bf16.mxu0 0
    %920 = vmatpush1.bf16.msra.mxu0 %v899
    %921 = vmatprep.subr.bf16.mxu0 0
    %922 = vmatpush1.bf16.msra.mxu0 %v900
    %923 = vmatprep.subr.bf16.mxu0 0
    %924 = vmatpush1.bf16.msra.mxu0 %v901
    %925 = vmatprep.subr.bf16.mxu0 0
    %926 = vmatpush1.bf16.msra.mxu0 %v902
    %927 = vmatprep.subr.bf16.mxu0 0
    %928 = vmatpush1.bf16.msra.mxu0 0
    %929 = vmatprep.subr.bf16.mxu0 0
    %930 = vmatpush1.bf16.msra.mxu0 0
    %931 = vmatprep.subr.bf16.mxu0 0
    %932 = vmatpush1.bf16.msra.mxu0 0
    %933 = vmatprep.subr.bf16.mxu0 0
    %934 = vmatpush1.bf16.msra.mxu0 0
    %935 = vmatprep.subr.bf16.mxu0 0
    %936 = vmatpush1.bf16.msra.mxu0 0
    %937 = vmatprep.subr.bf16.mxu0 0
    %938 = vmatpush1.bf16.msra.mxu0 0
    %939 = vmatprep.subr.bf16.mxu0 0
    %940 = vmatpush1.bf16.msra.mxu0 0
    %941 = vmatprep.subr.bf16.mxu0 0
    %942 = vmatpush1.bf16.msra.mxu0 0
    %943 = vmatprep.mubr.bf16.mxu0 0
    %944 = vmatmul.mubr.bf16.gmra.mrb[0].mxu0 %v829
    %v945 = vpop.f32.mrb[0].mxu0
    %v946 = vadd.f32 0.0, %v945
    %v947 = vpop.f32.mrb[0].mxu0
    %v948 = vpop.f32.mrb[0].mxu0
    %v949 = vadd.f32 0.0, %v948
    %v950 = vpop.f32.mrb[0].mxu0
    %951 = vmatprep.mubr.bf16.mxu0 0
    %952 = vmatmul.mubr.bf16.gmra.mrb[0].mxu0 %v830
    %v953 = vpop.f32.mrb[0].mxu0
    %v954 = vadd.f32 0.0, %v953
    %v955 = vpop.f32.mrb[0].mxu0
    %v956 = vpop.f32.mrb[0].mxu0
    %v957 = vadd.f32 0.0, %v956
    %v958 = vpop.f32.mrb[0].mxu0
    %959 = vdwg.mxu0
    %v976 = vunpack.c.l.b16 %v831
    %v977 = vunpack.c.l.b16 %v832
    %v978 = vunpack.c.l.b16 %v833
    %v979 = vunpack.c.l.b16 %v834
    %v980 = vunpack.c.l.b16 %v835
    %v981 = vunpack.c.l.b16 %v836
    %v982 = vunpack.c.l.b16 %v837
    %v983 = vunpack.c.l.b16 %v838
    %v984 = vunpack.c.l.b16 %v839
    %v985 = vunpack.c.l.b16 %v840
    %v986 = vunpack.c.l.b16 %v841
    %v987 = vunpack.c.l.b16 %v842
    %v988 = vunpack.c.l.b16 %v843
    %v989 = vunpack.c.l.b16 %v844
    %v990 = vunpack.c.l.b16 %v845
    %v991 = vunpack.c.l.b16 %v846
    %v992 = vpack.c.b16 %v977, %v976
    %v993 = vpack.c.b16 %v979, %v978
    %v994 = vpack.c.b16 %v981, %v980
    %v995 = vpack.c.b16 %v983, %v982
    %v996 = vpack.c.b16 %v985, %v984
    %v997 = vpack.c.b16 %v987, %v986
    %v998 = vpack.c.b16 %v989, %v988
    %v999 = vpack.c.b16 %v991, %v990
    %1008 = vmatprep.subr.bf16.mxu0 0
    %1009 = vmatpush1.bf16.msra.mxu0 %v992
    %1010 = vmatprep.subr.bf16.mxu0 0
    %1011 = vmatpush1.bf16.msra.mxu0 %v993
    %1012 = vmatprep.subr.bf16.mxu0 0
    %1013 = vmatpush1.bf16.msra.mxu0 %v994
    %1014 = vmatprep.subr.bf16.mxu0 0
    %1015 = vmatpush1.bf16.msra.mxu0 %v995
    %1016 = vmatprep.subr.bf16.mxu0 0
    %1017 = vmatpush1.bf16.msra.mxu0 %v996
    %1018 = vmatprep.subr.bf16.mxu0 0
    %1019 = vmatpush1.bf16.msra.mxu0 %v997
    %1020 = vmatprep.subr.bf16.mxu0 0
    %1021 = vmatpush1.bf16.msra.mxu0 %v998
    %1022 = vmatprep.subr.bf16.mxu0 0
    %1023 = vmatpush1.bf16.msra.mxu0 %v999
    %1024 = vmatprep.subr.bf16.mxu0 0
    %1025 = vmatpush1.bf16.msra.mxu0 0
    %1026 = vmatprep.subr.bf16.mxu0 0
    %1027 = vmatpush1.bf16.msra.mxu0 0
    %1028 = vmatprep.subr.bf16.mxu0 0
    %1029 = vmatpush1.bf16.msra.mxu0 0
    %1030 = vmatprep.subr.bf16.mxu0 0
    %1031 = vmatpush1.bf16.msra.mxu0 0
    %1032 = vmatprep.subr.bf16.mxu0 0
    %1033 = vmatpush1.bf16.msra.mxu0 0
    %1034 = vmatprep.subr.bf16.mxu0 0
    %1035 = vmatpush1.bf16.msra.mxu0 0
    %1036 = vmatprep.subr.bf16.mxu0 0
    %1037 = vmatpush1.bf16.msra.mxu0 0
    %1038 = vmatprep.subr.bf16.mxu0 0
    %1039 = vmatpush1.bf16.msra.mxu0 0
    %1040 = vmatprep.mubr.bf16.mxu0 0
    %1041 = vmatmul.mubr.bf16.gmra.mrb[0].mxu0 %v825
    %v1042 = vpop.f32.mrb[0].mxu0
    %v1043 = vadd.f32 %v946, %v1042
    %v1044 = vpop.f32.mrb[0].mxu0
    %v1045 = vpop.f32.mrb[0].mxu0
    %v1046 = vadd.f32 %v949, %v1045
    %v1047 = vpop.f32.mrb[0].mxu0
    %1048 = vmatprep.mubr.bf16.mxu0 0
    %1049 = vmatmul.mubr.bf16.gmra.mrb[0].mxu0 %v826
    %v1050 = vpop.f32.mrb[0].mxu0
    %v1051 = vadd.f32 %v954, %v1050
    %v1052 = vpop.f32.mrb[0].mxu0
    %v1053 = vpop.f32.mrb[0].mxu0
    %v1054 = vadd.f32 %v957, %v1053
    %v1055 = vpop.f32.mrb[0].mxu0
    %1056 = vdwg.mxu0
    %v1057 = vld [vmem:[#allocation5 + $0x80] sm:$0xf]
    %v1058 = vld [vmem:[#allocation5 + $0x84] sm:$0xf]
    %v1059 = vld [vmem:[#allocation5 + $0x88] sm:$0xf]
    %v1060 = vld [vmem:[#allocation5 + $0x8c] sm:$0xf]
    %v1061 = vld [vmem:[#allocation5 + $0x90] sm:$0xf]
    %v1062 = vld [vmem:[#allocation5 + $0x94] sm:$0xf]
    %v1063 = vld [vmem:[#allocation5 + $0x98] sm:$0xf]
    %v1064 = vld [vmem:[#allocation5 + $0x9c] sm:$0xf]
    %v1065 = vld [vmem:[#allocation5 + $0xa0] sm:$0xf]
    %v1066 = vld [vmem:[#allocation5 + $0xa4] sm:$0xf]
    %v1067 = vld [vmem:[#allocation5 + $0xa8] sm:$0xf]
    %v1068 = vld [vmem:[#allocation5 + $0xac] sm:$0xf]
    %v1069 = vld [vmem:[#allocation5 + $0xb0] sm:$0xf]
    %v1070 = vld [vmem:[#allocation5 + $0xb4] sm:$0xf]
    %v1071 = vld [vmem:[#allocation5 + $0xb8] sm:$0xf]
    %v1072 = vld [vmem:[#allocation5 + $0xbc] sm:$0xf]
    %v1089 = vunpack.c.l.b16 %v1057
    %v1090 = vunpack.c.l.b16 %v1058
    %v1091 = vunpack.c.l.b16 %v1059
    %v1092 = vunpack.c.l.b16 %v1060
    %v1093 = vunpack.c.l.b16 %v1061
    %v1094 = vunpack.c.l.b16 %v1062
    %v1095 = vunpack.c.l.b16 %v1063
    %v1096 = vunpack.c.l.b16 %v1064
    %v1097 = vunpack.c.l.b16 %v1065
    %v1098 = vunpack.c.l.b16 %v1066
    %v1099 = vunpack.c.l.b16 %v1067
    %v1100 = vunpack.c.l.b16 %v1068
    %v1101 = vunpack.c.l.b16 %v1069
    %v1102 = vunpack.c.l.b16 %v1070
    %v1103 = vunpack.c.l.b16 %v1071
    %v1104 = vunpack.c.l.b16 %v1072
    %v1105 = vpack.c.b16 %v1090, %v1089
    %v1106 = vpack.c.b16 %v1092, %v1091
    %v1107 = vpack.c.b16 %v1094, %v1093
    %v1108 = vpack.c.b16 %v1096, %v1095
    %v1109 = vpack.c.b16 %v1098, %v1097
    %v1110 = vpack.c.b16 %v1100, %v1099
    %v1111 = vpack.c.b16 %v1102, %v1101
    %v1112 = vpack.c.b16 %v1104, %v1103
    %1121 = vmatprep.subr.bf16.mxu0 0
    %1122 = vmatpush1.bf16.msra.mxu0 %v1105
    %1123 = vmatprep.subr.bf16.mxu0 0
    %1124 = vmatpush1.bf16.msra.mxu0 %v1106
    %1125 = vmatprep.subr.bf16.mxu0 0
    %1126 = vmatpush1.bf16.msra.mxu0 %v1107
    %1127 = vmatprep.subr.bf16.mxu0 0
    %1128 = vmatpush1.bf16.msra.mxu0 %v1108
    %1129 = vmatprep.subr.bf16.mxu0 0
    %1130 = vmatpush1.bf16.msra.mxu0 %v1109
    %1131 = vmatprep.subr.bf16.mxu0 0
    %1132 = vmatpush1.bf16.msra.mxu0 %v1110
    %1133 = vmatprep.subr.bf16.mxu0 0
    %1134 = vmatpush1.bf16.msra.mxu0 %v1111
    %1135 = vmatprep.subr.bf16.mxu0 0
    %1136 = vmatpush1.bf16.msra.mxu0 %v1112
    %1137 = vmatprep.subr.bf16.mxu0 0
    %1138 = vmatpush1.bf16.msra.mxu0 0
    %1139 = vmatprep.subr.bf16.mxu0 0
    %1140 = vmatpush1.bf16.msra.mxu0 0
    %1141 = vmatprep.subr.bf16.mxu0 0
    %1142 = vmatpush1.bf16.msra.mxu0 0
    %1143 = vmatprep.subr.bf16.mxu0 0
    %1144 = vmatpush1.bf16.msra.mxu0 0
    %1145 = vmatprep.subr.bf16.mxu0 0
    %1146 = vmatpush1.bf16.msra.mxu0 0
    %1147 = vmatprep.subr.bf16.mxu0 0
    %1148 = vmatpush1.bf16.msra.mxu0 0
    %1149 = vmatprep.subr.bf16.mxu0 0
    %1150 = vmatpush1.bf16.msra.mxu0 0
    %1151 = vmatprep.subr.bf16.mxu0 0
    %1152 = vmatpush1.bf16.msra.mxu0 0
    %1153 = vmatprep.mubr.bf16.mxu0 0
    %1154 = vmatmul.mubr.bf16.gmra.mrb[0].mxu0 %v827
    %v1155 = vpop.f32.mrb[0].mxu0
    %v1156 = vadd.f32 0.0, %v1155
    %v1157 = vpop.f32.mrb[0].mxu0
    %v1158 = vpop.f32.mrb[0].mxu0
    %v1159 = vadd.f32 0.0, %v1158
    %v1160 = vpop.f32.mrb[0].mxu0
    %1161 = vmatprep.mubr.bf16.mxu0 0
    %1162 = vmatmul.mubr.bf16.gmra.mrb[0].mxu0 %v828
    %v1163 = vpop.f32.mrb[0].mxu0
    %v1164 = vadd.f32 0.0, %v1163
    %v1165 = vpop.f32.mrb[0].mxu0
    %v1166 = vpop.f32.mrb[0].mxu0
    %v1167 = vadd.f32 0.0, %v1166
    %v1168 = vpop.f32.mrb[0].mxu0
    %1169 = vdwg.mxu0
    %v1170 = vadd.f32 %v1043, %v1156
    %v1171 = vadd.f32 %v1046, %v1159
    %v1172 = vadd.f32 %v1051, %v1164
    %v1173 = vadd.f32 %v1054, %v1167
    %v1174 = vadd.f32 %v1170, %v1171
    %v1175 = vadd.f32 %v1174, %v1172
    %v1176 = vadd.f32 %v1175, %v1173
    %v1177 = vrot.slane %v1176, 4
    %v1178 = vadd.f32 %v1176, %v1177
    %v1179 = vrot.slane %v1178, 2
    %v1180 = vadd.f32 %v1178, %v1179
    %v1181 = vrot.slane %v1180, 1
    %v1182 = vadd.f32 %v1180, %v1181
    %v1183 = vmul.f32 %v1170, %v1170
    %v1184 = vmul.f32 %v1171, %v1171
    %v1185 = vmul.f32 %v1172, %v1172
    %v1186 = vmul.f32 %v1173, %v1173
    %v1187 = vadd.f32 %v1183, %v1184
    %v1188 = vadd.f32 %v1187, %v1185
    %v1189 = vadd.f32 %v1188, %v1186
    %v1190 = vrot.slane %v1189, 4
    %v1191 = vadd.f32 %v1189, %v1190
    %v1192 = vrot.slane %v1191, 2
    %v1193 = vadd.f32 %v1191, %v1192
    %v1194 = vrot.slane %v1193, 1
    %v1195 = vadd.f32 %v1193, %v1194
    %v1196 = vsel %vm518, %v1182, %v1195
    %1197 = vmatprep.subr.mxu0 0.0
    %1198 = vmatpush1.msra.mxu0 %v524
    %1199 = vmatprep.subr.mxu0 0.0
    %1200 = vmatpush1.msra.mxu0 %v525
    %1201 = vmatprep.subr.mxu0 0.0
    %1202 = vmatpush1.msra.mxu0 %v526
    %1203 = vmatprep.subr.mxu0 0.0
    %1204 = vmatpush1.msra.mxu0 %v527
    %1205 = vmatprep.subr.mxu0 0.0
    %1206 = vmatpush1.msra.mxu0 %v528
    %1207 = vmatprep.subr.mxu0 0.0
    %1208 = vmatpush1.msra.mxu0 %v529
    %1209 = vmatprep.subr.mxu0 0.0
    %1210 = vmatpush1.msra.mxu0 %v530
    %1211 = vmatprep.subr.mxu0 0.0
    %1212 = vmatpush1.msra.mxu0 %v531
    %1213 = vmatprep.subr.mxu0 0.0
    %1214 = vmatpush1.msra.mxu0 %v532
    %1215 = vmatprep.subr.mxu0 0.0
    %1216 = vmatpush1.msra.mxu0 %v533
    %1217 = vmatprep.subr.mxu0 0.0
    %1218 = vmatpush1.msra.mxu0 %v534
    %1219 = vmatprep.subr.mxu0 0.0
    %1220 = vmatpush1.msra.mxu0 %v535
    %1221 = vmatprep.subr.mxu0 0.0
    %1222 = vmatpush1.msra.mxu0 %v536
    %1223 = vmatprep.subr.mxu0 0.0
    %1224 = vmatpush1.msra.mxu0 %v537
    %1225 = vmatprep.subr.mxu0 0.0
    %1226 = vmatpush1.msra.mxu0 %v538
    %1227 = vmatprep.subr.mxu0 0.0
    %1228 = vmatpush1.msra.mxu0 %v539
    %1229 = vmatprep.subr.mxu0 0.0
    %1230 = vmatpush1.msra.mxu0 0.0
    %1231 = vmatprep.subr.mxu0 0.0
    %1232 = vmatpush1.msra.mxu0 0.0
    %1233 = vmatprep.subr.mxu0 0.0
    %1234 = vmatpush1.msra.mxu0 0.0
    %1235 = vmatprep.subr.mxu0 0.0
    %1236 = vmatpush1.msra.mxu0 0.0
    %1237 = vmatprep.subr.mxu0 0.0
    %1238 = vmatpush1.msra.mxu0 0.0
    %1239 = vmatprep.subr.mxu0 0.0
    %1240 = vmatpush1.msra.mxu0 0.0
    %1241 = vmatprep.subr.mxu0 0.0
    %1242 = vmatpush1.msra.mxu0 0.0
    %1243 = vmatprep.subr.mxu0 0.0
    %1244 = vmatpush1.msra.mxu0 0.0
    %1245 = vmatprep.subr.mxu0 0.0
    %1246 = vmatpush1.msra.mxu0 0.0
    %1247 = vmatprep.subr.mxu0 0.0
    %1248 = vmatpush1.msra.mxu0 0.0
    %1249 = vmatprep.subr.mxu0 0.0
    %1250 = vmatpush1.msra.mxu0 0.0
    %1251 = vmatprep.subr.mxu0 0.0
    %1252 = vmatpush1.msra.mxu0 0.0
    %1253 = vmatprep.subr.mxu0 0.0
    %1254 = vmatpush1.msra.mxu0 0.0
    %1255 = vmatprep.subr.mxu0 0.0
    %1256 = vmatpush1.msra.mxu0 0.0
    %1257 = vmatprep.subr.mxu0 0.0
    %1258 = vmatpush1.msra.mxu0 0.0
    %1259 = vmatprep.subr.mxu0 0.0
    %1260 = vmatpush1.msra.mxu0 0.0
    %1261 = vmatprep.mubr.f32.mxu0 0.0
    %1262 = vmatmul.mubr.f32.gmra.mrb[0].mxu0 %v1196
    %v1263 = vpop.f32.mrb[0].mxu0
    %v1264 = vadd.f32 0.0, %v1263
    %v1265 = vpop.f32.mrb[0].mxu0
    %1266 = vdwg.mxu0
    %v1267 = vmul.f32 %v1264, %v610
    %v1268 = vmul.f32 %v1267, %v1267
    %v1270 = vrot.slane %v1268, 7
    %v1272 = vsub.f32 %v1267, %v1270
    %v1273 = vld [vmem:[%s6] sm:$0x1]
    %v1274 = vadd.f32 %v1272, 1e-05
    %v1275 = vrsqrt.pop %v1274
    %v1278 = vunpack.c.l.s4 1966171168
    %v1279 = vunpack.c.0.s8 %v1278
    %v1280 = vlaneseq
    %v1281 = vshrl.u32 %v1280, 7
    %v1282 = vsub.s32 %v1279, %v1281
    %v1283 = vrot.slane %v1275, %v1282
    %v1284 = vcombine.high %v1283, %v1283
    %v1286 = vunpack.c.l.s4 1966171168
    %v1287 = vunpack.c.0.s8 %v1286
    %v1288 = vlaneseq
    %v1289 = vshrl.u32 %v1288, 7
    %v1290 = vsub.s32 %v1287, %v1289
    %v1291 = vrot.slane %v1284, %v1290
    %v1293 = vmul.f32 %v1273, %v1291
    %v1294 = vld [vmem:[%s7] sm:$0x1]
    %v1295 = vmul.f32 %v1267, %v1293
    %v1296 = vsub.f32 %v1294, %v1295
    %v1298 = vlaneseq
    %v1299 = vshrl.u32 %v1298, 7
    %v1300 = vsub.s32 0, %v1299
    %v1301 = vrot.slane %v1296, %v1300
    %v1303 = vsel %vm518, %v1293, %v1301
    %v1305 = vsel %vm687, %v1303, 0
    %1307 = vmatprep.subr.mxu0 0.0
    %1308 = vmatpush1.msra.mxu0 %v686
    %1309 = vmatprep.subr.mxu0 0.0
    %1310 = vmatpush1.msra.mxu0 0.0
    %1311 = vmatprep.subr.mxu0 0.0
    %1312 = vmatpush1.msra.mxu0 0.0
    %1313 = vmatprep.subr.mxu0 0.0
    %1314 = vmatpush1.msra.mxu0 0.0
    %1315 = vmatprep.subr.mxu0 0.0
    %1316 = vmatpush1.msra.mxu0 0.0
    %1317 = vmatprep.subr.mxu0 0.0
    %1318 = vmatpush1.msra.mxu0 0.0
    %1319 = vmatprep.subr.mxu0 0.0
    %1320 = vmatpush1.msra.mxu0 0.0
    %1321 = vmatprep.subr.mxu0 0.0
    %1322 = vmatpush1.msra.mxu0 0.0
    %1323 = vmatprep.subr.mxu0 0.0
    %1324 = vmatpush1.msra.mxu0 0.0
    %1325 = vmatprep.subr.mxu0 0.0
    %1326 = vmatpush1.msra.mxu0 0.0
    %1327 = vmatprep.subr.mxu0 0.0
    %1328 = vmatpush1.msra.mxu0 0.0
    %1329 = vmatprep.subr.mxu0 0.0
    %1330 = vmatpush1.msra.mxu0 0.0
    %1331 = vmatprep.subr.mxu0 0.0
    %1332 = vmatpush1.msra.mxu0 0.0
    %1333 = vmatprep.subr.mxu0 0.0
    %1334 = vmatpush1.msra.mxu0 0.0
    %1335 = vmatprep.subr.mxu0 0.0
    %1336 = vmatpush1.msra.mxu0 0.0
    %1337 = vmatprep.subr.mxu0 0.0
    %1338 = vmatpush1.msra.mxu0 0.0
    %1339 = vmatprep.subr.mxu0 0.0
    %1340 = vmatpush1.msra.mxu0 0.0
    %1341 = vmatprep.subr.mxu0 0.0
    %1342 = vmatpush1.msra.mxu0 0.0
    %1343 = vmatprep.subr.mxu0 0.0
    %1344 = vmatpush1.msra.mxu0 0.0
    %1345 = vmatprep.subr.mxu0 0.0
    %1346 = vmatpush1.msra.mxu0 0.0
    %1347 = vmatprep.subr.mxu0 0.0
    %1348 = vmatpush1.msra.mxu0 0.0
    %1349 = vmatprep.subr.mxu0 0.0
    %1350 = vmatpush1.msra.mxu0 0.0
    %1351 = vmatprep.subr.mxu0 0.0
    %1352 = vmatpush1.msra.mxu0 0.0
    %1353 = vmatprep.subr.mxu0 0.0
    %1354 = vmatpush1.msra.mxu0 0.0
    %1355 = vmatprep.subr.mxu0 0.0
    %1356 = vmatpush1.msra.mxu0 0.0
    %1357 = vmatprep.subr.mxu0 0.0
    %1358 = vmatpush1.msra.mxu0 0.0
    %1359 = vmatprep.subr.mxu0 0.0
    %1360 = vmatpush1.msra.mxu0 0.0
    %1361 = vmatprep.subr.mxu0 0.0
    %1362 = vmatpush1.msra.mxu0 0.0
    %1363 = vmatprep.subr.mxu0 0.0
    %1364 = vmatpush1.msra.mxu0 0.0
    %1365 = vmatprep.subr.mxu0 0.0
    %1366 = vmatpush1.msra.mxu0 0.0
    %1367 = vmatprep.subr.mxu0 0.0
    %1368 = vmatpush1.msra.mxu0 0.0
    %1369 = vmatprep.subr.mxu0 0.0
    %1370 = vmatpush1.msra.mxu0 0.0
    %1371 = vmatprep.mubr.f32.mxu0 0.0
    %1372 = vmatmul.mubr.f32.gmra.mrb[0].mxu0 %v1305
    %v1373 = vpop.f32.mrb[0].mxu0
    %v1374 = vadd.f32 0.0, %v1373
    %v1375 = vpop.f32.mrb[0].mxu0
    %1376 = vdwg.mxu0
    %v1377 = vlaneseq
    %v1378 = vshrl.u32 %v1377, 7
    %v1379 = vsub.s32 0, %v1378
    %v1380 = vrot.slane %v1374, %v1379
    %v1381 = vmul.f32 %v1170, %v1380
    %v1382 = vmul.f32 %v1171, %v1380
    %v1383 = vmul.f32 %v1172, %v1380
    %v1384 = vmul.f32 %v1173, %v1380
    %v1385 = vlaneseq
    %v1386 = vshrl.u32 %v1385, 7
    %v1387 = vsub.s32 1, %v1386
    %v1388 = vrot.slane %v1374, %v1387
    %v1389 = vadd.f32 %v1381, %v1388
    %v1390 = vadd.f32 %v1382, %v1388
    %v1391 = vadd.f32 %v1383, %v1388
    %v1392 = vadd.f32 %v1384, %v1388
    %v1393 = vadd.f32 %v1389, %v797
    %v1394 = vadd.f32 %v1390, %v798
    %v1395 = vadd.f32 %v1391, %v799
    %v1396 = vadd.f32 %v1392, %v800
    %v1397 = vmul.f32 %v1393, 0.2
    %v1398 = vmul.f32 %v1394, 0.2
    %v1399 = vmul.f32 %v1395, 0.2
    %v1400 = vmul.f32 %v1396, 0.2
    %v1401 = vmax.f32 %v1393, %v1397
    %v1402 = vmax.f32 %v1394, %v1398
    %v1403 = vmax.f32 %v1395, %v1399
    %v1404 = vmax.f32 %v1396, %v1400
    %1405 = vst [vmem:[#allocation7] sm:$0xff] %v1401
    %1406 = vst [vmem:[#allocation7 + $0x8] sm:$0xff] %v1402
    %1407 = vst [vmem:[#allocation7 + $0x10] sm:$0xff] %v1403
    %1408 = vst [vmem:[#allocation7 + $0x18] sm:$0xff] %v1404
    // Predicated region
    $region58: #{tpu_custom_call.1} parent=1 // pred_check
      _
    $region59: #{tpu_custom_call.1} parent=1 // pred_check_branch
      %1410 = sbr.rel (0) target = $region61
    $region60: #{tpu_custom_call.1} parent=1 // pred_region
      %s1412 = ssub.s32 512, 512
      %1413 = vsyncadd [#allocation4], %s1412
      %s1414 = sshll.u32 [#allocation7], 4
      %s1415 = int_to_ptr.vmem [resolvable:$true] %s1414
      %1420 = dma.vmem_to_hbm [thread:$0]  %s1415, 512, %s12, [#allocation4], 128, 128, 8
    $region61: #{tpu_custom_call.1} parent=1 // pred_fallthru
      _
    // Predicated region
    $region62: #{tpu_custom_call.1} parent=1 // pred_check
      _
    $region63: #{tpu_custom_call.1} parent=1 // pred_check_branch
      %1422 = sbr.rel (0) target = $region65
    $region64: #{tpu_custom_call.1} parent=1 // pred_region
      %1423 = dma.done [#allocation4], 512
    $region65: #{tpu_custom_call.1} parent=1 // pred_fallthru
      _
    %1424 = vsyncpa [#allocation3], 1
    %1425 = vsyncpa [#allocation6], 1
    %1426 = vsyncpa [#allocation4], 1

</llo_original>
